<compile_context>
chip_gen: v6e
topology: v6e:2x2x1
jax: 0.10.0
libtpu: 0.0.40
codegen_flags: <defaults>
</compile_context>

<pallas_src>
import functools

import jax
import jax.numpy as jnp
from jax import lax
from jax.experimental import pallas as pl
from jax.experimental.pallas import tpu as pltpu

NEG_SLOPE = 0.1


# ------------------------------ fused kernel ---------------------------------

def _fused_down_kernel(x_ref, pw_ref, jo_ref, w1_ref, b1_ref, w2_ref, b2_ref, o_ref,
                       poolbuf, a_pad, y1_pad, *, cin, cout, h, w, k, padw):
    # x_ref:   (cin*ho, 2*w)  one NCHW image; each row = two adjacent input rows (h-pair)
    # pw_ref:  (w, wo)        constant 0.25 W-pool matrix (hoisted to wrapper)
    # jo_ref:  (1, m) int32   hoisted output-column index (for horizontal halo masks)
    # w1_ref:  (k*k, cout, cin)  bf16 per-tap matrices, tap index t = kh*k + kw
    # b1_ref:  (cout, 1) f32
    # w2_ref:  (k*k, cout, cout) bf16
    # b2_ref:  (cout, 1) f32
    # o_ref:   (cout, ho*wo)  lane-dense output (spatial on lanes)
    pad = (k - 1) // 2
    ho, wo = h // 2, w // 2
    m = ho * wo
    f32 = jnp.float32
    cdt = a_pad.dtype                                           # bf16 activations

    # ---- horizontal-halo masks (one cmp pair per dw, reused by both convs) ----
    jo = jo_ref[...]                                            # (1, m) int32
    masks = {dw: (jo + dw >= 0) & (jo + dw < wo)
             for dw in range(-pad, pad + 1) if dw != 0}

    # ---- zero only the halo columns; payload lanes are fully overwritten below ----
    a_pad[:, pl.ds(0, padw)] = jnp.zeros((cin, padw), cdt)
    a_pad[:, pl.ds(padw + m, padw)] = jnp.zeros((cin, padw), cdt)
    y1_pad[:, pl.ds(0, padw)] = jnp.zeros((cout, padw), cdt)
    y1_pad[:, pl.ds(padw + m, padw)] = jnp.zeros((cout, padw), cdt)

    # ---- 2x2 average pool: H-pool = lane-split add, W-pool = tiny hoisted matmul ----
    xh = x_ref[:, :w] + x_ref[:, w:]                            # (cin*ho, w), rows c*ho+io
    poolbuf[...] = jnp.dot(xh, pw_ref[...], preferred_element_type=f32)   # (cin*ho, wo)

    # ---- repack pooled rows into the lane-dense flat padded layout ----
    #   a_pad[c, padw + io*wo + j] = pooled[c, io, j]
    # TODO(synk): for large Ho move this (and the pooling) under a row-block grid axis.
    for io in range(ho):
        a_pad[:, pl.ds(padw + io * wo, wo)] = \
            poolbuf[pl.ds(io, cin, stride=ho), :].astype(cdt)

    # ---- KxK conv as K*K accumulated tap-GEMMs (no im2col buffers) ----
    def conv_taps(src_pad, w_ref, b_ref):
        acc = jnp.broadcast_to(b_ref[...], (cout, m))           # f32 init with bias
        for kh in range(k):
            for kw in range(k):
                dh, dw = kh - pad, kw - pad
                sl = src_pad[:, pl.ds(padw + dh * wo + dw, m)]  # (c, m) bf16, static start
                if dw != 0:
                    sl = jnp.where(masks[dw], sl, jnp.zeros((), cdt))
                acc = acc + jnp.dot(w_ref[kh * k + kw], sl,
                                    preferred_element_type=f32)
        return acc

    # conv1 + leaky_relu
    a1 = conv_taps(a_pad, w1_ref, b1_ref)                       # (cout, m) f32
    y1 = jnp.maximum(a1, NEG_SLOPE * a1)
    y1_pad[:, pl.ds(padw, m)] = y1.astype(cdt)

    # conv2 + leaky_relu
    a2 = conv_taps(y1_pad, w2_ref, b2_ref)
    o_ref[...] = jnp.maximum(a2, NEG_SLOPE * a2).astype(o_ref.dtype)


# -------------------------------- wrapper -------------------------------------

def _round_up(x, mult):
    return ((x + mult - 1) // mult) * mult


@functools.partial(jax.jit, static_argnames=("filter_size",))
def down_forward(x_nchw, w1, b1, w2, b2, *, filter_size):
    k = filter_size
    pad = (k - 1) // 2
    n, cin, h, w = x_nchw.shape
    cout = w1.shape[0]
    assert h % 2 == 0 and w % 2 == 0 and k % 2 == 1
    ho, wo = h // 2, w // 2
    m = ho * wo
    # lane-aligned halo; invariant padw >= pad*wo + pad keeps vertical-halo reads in the zeros
    padw = _round_up(max(pad * (wo + 1), 1), 128)

    # metadata-only reshape: each row packs the two input rows of one pooled output row
    x2 = x_nchw.reshape(n, cin * ho, 2 * w)

    # grid-invariant constants hoisted out of the kernel (DMA'd once, stay resident)
    pw = (jnp.arange(w)[:, None] // 2 == jnp.arange(wo)[None, :]).astype(jnp.float32) * 0.25
    jo = (jnp.arange(m, dtype=jnp.int32) % wo).reshape(1, m)

    # per-tap weight matrices w[t, o, c] = w[o, c, kh, kw]; bf16 MXU feed
    w1t = jnp.transpose(w1, (2, 3, 0, 1)).reshape(k * k, cout, cin).astype(jnp.bfloat16)
    w2t = jnp.transpose(w2, (2, 3, 0, 1)).reshape(k * k, cout, cout).astype(jnp.bfloat16)
    b1c = b1.reshape(cout, 1).astype(jnp.float32)
    b2c = b2.reshape(cout, 1).astype(jnp.float32)

    kernel = functools.partial(_fused_down_kernel,
                               cin=cin, cout=cout, h=h, w=w, k=k, padw=padw)

    out_flat = pl.pallas_call(
        kernel,
        out_shape=jax.ShapeDtypeStruct((n, cout, m), jnp.float32),
        grid=(n,),
        in_specs=[
            pl.BlockSpec((None, cin * ho, 2 * w), lambda i: (i, 0, 0)),
            pl.BlockSpec((w, wo), lambda i: (0, 0)),
            pl.BlockSpec((1, m), lambda i: (0, 0)),
            pl.BlockSpec((k * k, cout, cin), lambda i: (0, 0, 0)),
            pl.BlockSpec((cout, 1), lambda i: (0, 0)),
            pl.BlockSpec((k * k, cout, cout), lambda i: (0, 0, 0)),
            pl.BlockSpec((cout, 1), lambda i: (0, 0)),
        ],
        out_specs=pl.BlockSpec((None, cout, m), lambda i: (i, 0, 0)),
        scratch_shapes=[
            pltpu.VMEM((cin * ho, wo), jnp.float32),             # poolbuf (pooled, c-major)
            pltpu.VMEM((cin, padw + m + padw), jnp.bfloat16),    # flat padded pooled act
            pltpu.VMEM((cout, padw + m + padw), jnp.bfloat16),   # flat padded conv1 act
        ],
        compiler_params=pltpu.CompilerParams(dimension_semantics=("parallel",)),
    )(x2, pw, jo, w1t, b1c, w2t, b2c)

    # metadata-only reshape back to NCHW output
    return out_flat.reshape(n, cout, ho, wo)


# ------------------------------- reference ------------------------------------

def _ref_forward(x, w1, b1, w2, b2, filter_size):
    pad = (filter_size - 1) // 2
    n, c, h, w = x.shape
    pooled = x.reshape(n, c, h // 2, 2, w // 2, 2).mean(axis=(3, 5))

    def conv(z, wt, bs):
        y = lax.conv_general_dilated(
            z, wt, window_strides=(1, 1), padding=[(pad, pad), (pad, pad)],
            dimension_numbers=("NCHW", "OIHW", "NCHW"))
        return y + bs[None, :, None, None]

    y = conv(pooled, w1, b1)
    y = jnp.where(y >= 0, y, NEG_SLOPE * y)
    y = conv(y, w2, b2)
    y = jnp.where(y >= 0, y, NEG_SLOPE * y)
    return y


# --------------------------------- main ----------------------------------------

if __name__ == "__main__":
    in_channels, out_channels, filter_size = 4, 8, 3
    N, H, W = 2, 16, 16

    key = jax.random.PRNGKey(0)
    kx, k1w, k1b, k2w, k2b = jax.random.split(key, 5)
    x = jax.random.normal(kx, (N, in_channels, H, W), dtype=jnp.float32)
    w1 = 0.1 * jax.random.normal(k1w, (out_channels, in_channels, filter_size, filter_size), jnp.float32)
    b1 = 0.1 * jax.random.normal(k1b, (out_channels,), jnp.float32)
    w2 = 0.1 * jax.random.normal(k2w, (out_channels, out_channels, filter_size, filter_size), jnp.float32)
    b2 = 0.1 * jax.random.normal(k2b, (out_channels,), jnp.float32)

    out = jax.block_until_ready(down_forward(x, w1, b1, w2, b2, filter_size=filter_size))
    ref = jax.block_until_ready(_ref_forward(x, w1, b1, w2, b2, filter_size))

    assert out.shape == (N, out_channels, H // 2, W // 2), out.shape
    max_err = float(jnp.max(jnp.abs(out - ref)))
    assert max_err < 2e-2, f"mismatch vs reference: max abs err {max_err}"

    print("KERNEL_OK")
</pallas_src>

<mosaic_0001>
module attributes {stable_mosaic.version = 11 : i64} {
  func.func @_fused_down_kernel(%arg0: i32, %arg1: memref<1x32x32xf32, #tpu.memory_space<vmem>>, %arg2: memref<16x8xf32, #tpu.memory_space<vmem>>, %arg3: memref<1x64xi32, #tpu.memory_space<vmem>>, %arg4: memref<9x8x4xbf16, #tpu.memory_space<vmem>>, %arg5: memref<8x1xf32, #tpu.memory_space<vmem>>, %arg6: memref<9x8x8xbf16, #tpu.memory_space<vmem>>, %arg7: memref<8x1xf32, #tpu.memory_space<vmem>>, %arg8: memref<1x8x64xf32, #tpu.memory_space<vmem>>, %arg9: memref<32x8xf32, #tpu.memory_space<vmem>>, %arg10: memref<4x320xbf16, #tpu.memory_space<vmem>>, %arg11: memref<8x320xbf16, #tpu.memory_space<vmem>>) attributes {dimension_semantics = [#tpu.dimension_semantics<parallel>], iteration_bounds = array<i64: 2>, scalar_prefetch = 0 : i64, scratch_operands = 3 : i64, tpu.core_type = #tpu.core_type<tc>, window_params = [{transform_indices = @transform_0, window_bounds = array<i64: 1, 32, 32>}, {pipeline_mode = #tpu.pipeline_mode<synchronous>, transform_indices = @transform_1, window_bounds = array<i64: 16, 8>}, {pipeline_mode = #tpu.pipeline_mode<synchronous>, transform_indices = @transform_2, window_bounds = array<i64: 1, 64>}, {pipeline_mode = #tpu.pipeline_mode<synchronous>, transform_indices = @transform_3, window_bounds = array<i64: 9, 8, 4>}, {pipeline_mode = #tpu.pipeline_mode<synchronous>, transform_indices = @transform_4, window_bounds = array<i64: 8, 1>}, {pipeline_mode = #tpu.pipeline_mode<synchronous>, transform_indices = @transform_5, window_bounds = array<i64: 9, 8, 8>}, {pipeline_mode = #tpu.pipeline_mode<synchronous>, transform_indices = @transform_6, window_bounds = array<i64: 8, 1>}, {transform_indices = @transform_7, window_bounds = array<i64: 1, 8, 64>}]} {
    %c0 = arith.constant 0 : index
    %c0_0 = arith.constant 0 : index
    %0 = vector.load %arg3[%c0, %c0_0] : memref<1x64xi32, #tpu.memory_space<vmem>>, vector<1x64xi32>
    %c-1_i32 = arith.constant -1 : i32
    %1 = vector.broadcast %c-1_i32 : i32 to vector<1x64xi32>
    %2 = arith.addi %0, %1 : vector<1x64xi32>
    %c0_i32 = arith.constant 0 : i32
    %3 = vector.broadcast %c0_i32 : i32 to vector<1x64xi32>
    %4 = arith.cmpi sge, %2, %3 : vector<1x64xi32>
    %c-1_i32_1 = arith.constant -1 : i32
    %5 = vector.broadcast %c-1_i32_1 : i32 to vector<1x64xi32>
    %6 = arith.addi %0, %5 : vector<1x64xi32>
    %c8_i32 = arith.constant 8 : i32
    %7 = vector.broadcast %c8_i32 : i32 to vector<1x64xi32>
    %8 = arith.cmpi slt, %6, %7 : vector<1x64xi32>
    %9 = arith.andi %4, %8 : vector<1x64xi1>
    %c1_i32 = arith.constant 1 : i32
    %10 = vector.broadcast %c1_i32 : i32 to vector<1x64xi32>
    %11 = arith.addi %0, %10 : vector<1x64xi32>
    %c0_i32_2 = arith.constant 0 : i32
    %12 = vector.broadcast %c0_i32_2 : i32 to vector<1x64xi32>
    %13 = arith.cmpi sge, %11, %12 : vector<1x64xi32>
    %c1_i32_3 = arith.constant 1 : i32
    %14 = vector.broadcast %c1_i32_3 : i32 to vector<1x64xi32>
    %15 = arith.addi %0, %14 : vector<1x64xi32>
    %c8_i32_4 = arith.constant 8 : i32
    %16 = vector.broadcast %c8_i32_4 : i32 to vector<1x64xi32>
    %17 = arith.cmpi slt, %15, %16 : vector<1x64xi32>
    %18 = arith.andi %13, %17 : vector<1x64xi1>
    %cst = arith.constant 0.000000e+00 : bf16
    %19 = vector.broadcast %cst : bf16 to vector<4x128xbf16>
    %c0_5 = arith.constant 0 : index
    %c0_6 = arith.constant 0 : index
    %20 = vector.load %arg10[%c0_5, %c0_6] : memref<4x320xbf16, #tpu.memory_space<vmem>>, vector<4x128xbf16>
    tpu.vector_store %arg10[%c0_5, %c0_6], %19 {strides = array<i32>} : memref<4x320xbf16, #tpu.memory_space<vmem>>, vector<4x128xbf16>,
    %cst_7 = arith.constant 0.000000e+00 : bf16
    %21 = vector.broadcast %cst_7 : bf16 to vector<4x128xbf16>
    %c0_8 = arith.constant 0 : index
    %c192 = arith.constant 192 : index
    %22 = vector.load %arg10[%c0_8, %c192] : memref<4x320xbf16, #tpu.memory_space<vmem>>, vector<4x128xbf16>
    tpu.vector_store %arg10[%c0_8, %c192], %21 {strides = array<i32>} : memref<4x320xbf16, #tpu.memory_space<vmem>>, vector<4x128xbf16>,
    %cst_9 = arith.constant 0.000000e+00 : bf16
    %23 = vector.broadcast %cst_9 : bf16 to vector<8x128xbf16>
    %c0_10 = arith.constant 0 : index
    %c0_11 = arith.constant 0 : index
    %24 = vector.load %arg11[%c0_10, %c0_11] : memref<8x320xbf16, #tpu.memory_space<vmem>>, vector<8x128xbf16>
    tpu.vector_store %arg11[%c0_10, %c0_11], %23 {strides = array<i32>} : memref<8x320xbf16, #tpu.memory_space<vmem>>, vector<8x128xbf16>,
    %cst_12 = arith.constant 0.000000e+00 : bf16
    %25 = vector.broadcast %cst_12 : bf16 to vector<8x128xbf16>
    %c0_13 = arith.constant 0 : index
    %c192_14 = arith.constant 192 : index
    %26 = vector.load %arg11[%c0_13, %c192_14] : memref<8x320xbf16, #tpu.memory_space<vmem>>, vector<8x128xbf16>
    tpu.vector_store %arg11[%c0_13, %c192_14], %25 {strides = array<i32>} : memref<8x320xbf16, #tpu.memory_space<vmem>>, vector<8x128xbf16>,
    %c0_15 = arith.constant 0 : index
    %c0_16 = arith.constant 0 : index
    %c0_17 = arith.constant 0 : index
    %27 = vector.load %arg1[%c0_15, %c0_16, %c0_17] : memref<1x32x32xf32, #tpu.memory_space<vmem>>, vector<1x32x16xf32>
    %28 = vector.shape_cast %27 : vector<1x32x16xf32> to vector<32x16xf32>
    %c0_18 = arith.constant 0 : index
    %c0_19 = arith.constant 0 : index
    %c16 = arith.constant 16 : index
    %29 = vector.load %arg1[%c0_18, %c0_19, %c16] : memref<1x32x32xf32, #tpu.memory_space<vmem>>, vector<1x32x16xf32>
    %30 = vector.shape_cast %29 : vector<1x32x16xf32> to vector<32x16xf32>
    %31 = arith.addf %28, %30 : vector<32x16xf32>
    %c0_20 = arith.constant 0 : index
    %c0_21 = arith.constant 0 : index
    %32 = vector.load %arg2[%c0_20, %c0_21] : memref<16x8xf32, #tpu.memory_space<vmem>>, vector<16x8xf32>
    %cst_22 = arith.constant dense<0.000000e+00> : vector<32x8xf32>
    %33 = tpu.matmul %31, %32, %cst_22 {dimension_numbers = #tpu.dot_dimension_numbers<[1], [0], [0], [1], [0, 0, 1, 1], [], []>} : vector<32x16xf32>, vector<16x8xf32>, vector<32x8xf32> -> vector<32x8xf32>
    %c0_23 = arith.constant 0 : index
    %c0_24 = arith.constant 0 : index
    %34 = vector.load %arg9[%c0_23, %c0_24] : memref<32x8xf32, #tpu.memory_space<vmem>>, vector<32x8xf32>
    tpu.vector_store %arg9[%c0_23, %c0_24], %33 {strides = array<i32>} : memref<32x8xf32, #tpu.memory_space<vmem>>, vector<32x8xf32>,
    %c0_25 = arith.constant 0 : index
    %c0_26 = arith.constant 0 : index
    %35 = tpu.strided_load %arg9[%c0_25, %c0_26] {strides = array<i32: 8, 1>} : memref<32x8xf32, #tpu.memory_space<vmem>>, vector<4x8xf32>
    %36 = arith.truncf %35 : vector<4x8xf32> to vector<4x8xbf16>
    %c0_27 = arith.constant 0 : index
    %c128 = arith.constant 128 : index
    %37 = vector.load %arg10[%c0_27, %c128] : memref<4x320xbf16, #tpu.memory_space<vmem>>, vector<4x8xbf16>
    tpu.vector_store %arg10[%c0_27, %c128], %36 {strides = array<i32>} : memref<4x320xbf16, #tpu.memory_space<vmem>>, vector<4x8xbf16>,
    %c1 = arith.constant 1 : index
    %c0_28 = arith.constant 0 : index
    %38 = tpu.strided_load %arg9[%c1, %c0_28] {strides = array<i32: 8, 1>} : memref<32x8xf32, #tpu.memory_space<vmem>>, vector<4x8xf32>
    %39 = arith.truncf %38 : vector<4x8xf32> to vector<4x8xbf16>
    %c0_29 = arith.constant 0 : index
    %c136 = arith.constant 136 : index
    %40 = vector.load %arg10[%c0_29, %c136] : memref<4x320xbf16, #tpu.memory_space<vmem>>, vector<4x8xbf16>
    tpu.vector_store %arg10[%c0_29, %c136], %39 {strides = array<i32>} : memref<4x320xbf16, #tpu.memory_space<vmem>>, vector<4x8xbf16>,
    %c2 = arith.constant 2 : index
    %c0_30 = arith.constant 0 : index
    %41 = tpu.strided_load %arg9[%c2, %c0_30] {strides = array<i32: 8, 1>} : memref<32x8xf32, #tpu.memory_space<vmem>>, vector<4x8xf32>
    %42 = arith.truncf %41 : vector<4x8xf32> to vector<4x8xbf16>
    %c0_31 = arith.constant 0 : index
    %c144 = arith.constant 144 : index
    %43 = vector.load %arg10[%c0_31, %c144] : memref<4x320xbf16, #tpu.memory_space<vmem>>, vector<4x8xbf16>
    tpu.vector_store %arg10[%c0_31, %c144], %42 {strides = array<i32>} : memref<4x320xbf16, #tpu.memory_space<vmem>>, vector<4x8xbf16>,
    %c3 = arith.constant 3 : index
    %c0_32 = arith.constant 0 : index
    %44 = tpu.strided_load %arg9[%c3, %c0_32] {strides = array<i32: 8, 1>} : memref<32x8xf32, #tpu.memory_space<vmem>>, vector<4x8xf32>
    %45 = arith.truncf %44 : vector<4x8xf32> to vector<4x8xbf16>
    %c0_33 = arith.constant 0 : index
    %c152 = arith.constant 152 : index
    %46 = vector.load %arg10[%c0_33, %c152] : memref<4x320xbf16, #tpu.memory_space<vmem>>, vector<4x8xbf16>
    tpu.vector_store %arg10[%c0_33, %c152], %45 {strides = array<i32>} : memref<4x320xbf16, #tpu.memory_space<vmem>>, vector<4x8xbf16>,
    %c4 = arith.constant 4 : index
    %c0_34 = arith.constant 0 : index
    %47 = tpu.strided_load %arg9[%c4, %c0_34] {strides = array<i32: 8, 1>} : memref<32x8xf32, #tpu.memory_space<vmem>>, vector<4x8xf32>
    %48 = arith.truncf %47 : vector<4x8xf32> to vector<4x8xbf16>
    %c0_35 = arith.constant 0 : index
    %c160 = arith.constant 160 : index
    %49 = vector.load %arg10[%c0_35, %c160] : memref<4x320xbf16, #tpu.memory_space<vmem>>, vector<4x8xbf16>
    tpu.vector_store %arg10[%c0_35, %c160], %48 {strides = array<i32>} : memref<4x320xbf16, #tpu.memory_space<vmem>>, vector<4x8xbf16>,
    %c5 = arith.constant 5 : index
    %c0_36 = arith.constant 0 : index
    %50 = tpu.strided_load %arg9[%c5, %c0_36] {strides = array<i32: 8, 1>} : memref<32x8xf32, #tpu.memory_space<vmem>>, vector<4x8xf32>
    %51 = arith.truncf %50 : vector<4x8xf32> to vector<4x8xbf16>
    %c0_37 = arith.constant 0 : index
    %c168 = arith.constant 168 : index
    %52 = vector.load %arg10[%c0_37, %c168] : memref<4x320xbf16, #tpu.memory_space<vmem>>, vector<4x8xbf16>
    tpu.vector_store %arg10[%c0_37, %c168], %51 {strides = array<i32>} : memref<4x320xbf16, #tpu.memory_space<vmem>>, vector<4x8xbf16>,
    %c6 = arith.constant 6 : index
    %c0_38 = arith.constant 0 : index
    %53 = tpu.strided_load %arg9[%c6, %c0_38] {strides = array<i32: 8, 1>} : memref<32x8xf32, #tpu.memory_space<vmem>>, vector<4x8xf32>
    %54 = arith.truncf %53 : vector<4x8xf32> to vector<4x8xbf16>
    %c0_39 = arith.constant 0 : index
    %c176 = arith.constant 176 : index
    %55 = vector.load %arg10[%c0_39, %c176] : memref<4x320xbf16, #tpu.memory_space<vmem>>, vector<4x8xbf16>
    tpu.vector_store %arg10[%c0_39, %c176], %54 {strides = array<i32>} : memref<4x320xbf16, #tpu.memory_space<vmem>>, vector<4x8xbf16>,
    %c7 = arith.constant 7 : index
    %c0_40 = arith.constant 0 : index
    %56 = tpu.strided_load %arg9[%c7, %c0_40] {strides = array<i32: 8, 1>} : memref<32x8xf32, #tpu.memory_space<vmem>>, vector<4x8xf32>
    %57 = arith.truncf %56 : vector<4x8xf32> to vector<4x8xbf16>
    %c0_41 = arith.constant 0 : index
    %c184 = arith.constant 184 : index
    %58 = vector.load %arg10[%c0_41, %c184] : memref<4x320xbf16, #tpu.memory_space<vmem>>, vector<4x8xbf16>
    tpu.vector_store %arg10[%c0_41, %c184], %57 {strides = array<i32>} : memref<4x320xbf16, #tpu.memory_space<vmem>>, vector<4x8xbf16>,
    %c0_42 = arith.constant 0 : index
    %c0_43 = arith.constant 0 : index
    %59 = vector.load %arg5[%c0_42, %c0_43] : memref<8x1xf32, #tpu.memory_space<vmem>>, vector<8x1xf32>
    %60 = vector.shape_cast %59 : vector<8x1xf32> to vector<8x1xf32>
    %61 = vector.broadcast %60 : vector<8x1xf32> to vector<8x64xf32>
    %c0_44 = arith.constant 0 : index
    %c119 = arith.constant 119 : index
    %62 = vector.load %arg10[%c0_44, %c119] : memref<4x320xbf16, #tpu.memory_space<vmem>>, vector<4x64xbf16>
    %cst_45 = arith.constant 0.000000e+00 : bf16
    %63 = vector.shape_cast %9 : vector<1x64xi1> to vector<1x64xi1>
    %64 = vector.broadcast %63 : vector<1x64xi1> to vector<4x64xi1>
    %65 = vector.broadcast %cst_45 : bf16 to vector<4x64xbf16>
    %66 = arith.select %64, %62, %65 : vector<4x64xi1>, vector<4x64xbf16>
    %c0_46 = arith.constant 0 : index
    %c0_47 = arith.constant 0 : index
    %c0_48 = arith.constant 0 : index
    %67 = vector.load %arg4[%c0_46, %c0_47, %c0_48] : memref<9x8x4xbf16, #tpu.memory_space<vmem>>, vector<1x8x4xbf16>
    %68 = vector.shape_cast %67 : vector<1x8x4xbf16> to vector<8x4xbf16>
    %cst_49 = arith.constant dense<0.000000e+00> : vector<8x64xf32>
    %69 = tpu.matmul %68, %66, %cst_49 {dimension_numbers = #tpu.dot_dimension_numbers<[1], [0], [0], [1], [0, 0, 1, 1], [], []>} : vector<8x4xbf16>, vector<4x64xbf16>, vector<8x64xf32> -> vector<8x64xf32>
    %70 = arith.addf %61, %69 : vector<8x64xf32>
    %c0_50 = arith.constant 0 : index
    %c120 = arith.constant 120 : index
    %71 = vector.load %arg10[%c0_50, %c120] : memref<4x320xbf16, #tpu.memory_space<vmem>>, vector<4x64xbf16>
    %c1_51 = arith.constant 1 : index
    %c0_52 = arith.constant 0 : index
    %c0_53 = arith.constant 0 : index
    %72 = vector.load %arg4[%c1_51, %c0_52, %c0_53] : memref<9x8x4xbf16, #tpu.memory_space<vmem>>, vector<1x8x4xbf16>
    %73 = vector.shape_cast %72 : vector<1x8x4xbf16> to vector<8x4xbf16>
    %cst_54 = arith.constant dense<0.000000e+00> : vector<8x64xf32>
    %74 = tpu.matmul %73, %71, %cst_54 {dimension_numbers = #tpu.dot_dimension_numbers<[1], [0], [0], [1], [0, 0, 1, 1], [], []>} : vector<8x4xbf16>, vector<4x64xbf16>, vector<8x64xf32> -> vector<8x64xf32>
    %75 = arith.addf %70, %74 : vector<8x64xf32>
    %c0_55 = arith.constant 0 : index
    %c121 = arith.constant 121 : index
    %76 = vector.load %arg10[%c0_55, %c121] : memref<4x320xbf16, #tpu.memory_space<vmem>>, vector<4x64xbf16>
    %cst_56 = arith.constant 0.000000e+00 : bf16
    %77 = vector.shape_cast %18 : vector<1x64xi1> to vector<1x64xi1>
    %78 = vector.broadcast %77 : vector<1x64xi1> to vector<4x64xi1>
    %79 = vector.broadcast %cst_56 : bf16 to vector<4x64xbf16>
    %80 = arith.select %78, %76, %79 : vector<4x64xi1>, vector<4x64xbf16>
    %c2_57 = arith.constant 2 : index
    %c0_58 = arith.constant 0 : index
    %c0_59 = arith.constant 0 : index
    %81 = vector.load %arg4[%c2_57, %c0_58, %c0_59] : memref<9x8x4xbf16, #tpu.memory_space<vmem>>, vector<1x8x4xbf16>
    %82 = vector.shape_cast %81 : vector<1x8x4xbf16> to vector<8x4xbf16>
    %cst_60 = arith.constant dense<0.000000e+00> : vector<8x64xf32>
    %83 = tpu.matmul %82, %80, %cst_60 {dimension_numbers = #tpu.dot_dimension_numbers<[1], [0], [0], [1], [0, 0, 1, 1], [], []>} : vector<8x4xbf16>, vector<4x64xbf16>, vector<8x64xf32> -> vector<8x64xf32>
    %84 = arith.addf %75, %83 : vector<8x64xf32>
    %c0_61 = arith.constant 0 : index
    %c127 = arith.constant 127 : index
    %85 = vector.load %arg10[%c0_61, %c127] : memref<4x320xbf16, #tpu.memory_space<vmem>>, vector<4x64xbf16>
    %cst_62 = arith.constant 0.000000e+00 : bf16
    %86 = vector.shape_cast %9 : vector<1x64xi1> to vector<1x64xi1>
    %87 = vector.broadcast %86 : vector<1x64xi1> to vector<4x64xi1>
    %88 = vector.broadcast %cst_62 : bf16 to vector<4x64xbf16>
    %89 = arith.select %87, %85, %88 : vector<4x64xi1>, vector<4x64xbf16>
    %c3_63 = arith.constant 3 : index
    %c0_64 = arith.constant 0 : index
    %c0_65 = arith.constant 0 : index
    %90 = vector.load %arg4[%c3_63, %c0_64, %c0_65] : memref<9x8x4xbf16, #tpu.memory_space<vmem>>, vector<1x8x4xbf16>
    %91 = vector.shape_cast %90 : vector<1x8x4xbf16> to vector<8x4xbf16>
    %cst_66 = arith.constant dense<0.000000e+00> : vector<8x64xf32>
    %92 = tpu.matmul %91, %89, %cst_66 {dimension_numbers = #tpu.dot_dimension_numbers<[1], [0], [0], [1], [0, 0, 1, 1], [], []>} : vector<8x4xbf16>, vector<4x64xbf16>, vector<8x64xf32> -> vector<8x64xf32>
    %93 = arith.addf %84, %92 : vector<8x64xf32>
    %c0_67 = arith.constant 0 : index
    %c128_68 = arith.constant 128 : index
    %94 = vector.load %arg10[%c0_67, %c128_68] : memref<4x320xbf16, #tpu.memory_space<vmem>>, vector<4x64xbf16>
    %c4_69 = arith.constant 4 : index
    %c0_70 = arith.constant 0 : index
    %c0_71 = arith.constant 0 : index
    %95 = vector.load %arg4[%c4_69, %c0_70, %c0_71] : memref<9x8x4xbf16, #tpu.memory_space<vmem>>, vector<1x8x4xbf16>
    %96 = vector.shape_cast %95 : vector<1x8x4xbf16> to vector<8x4xbf16>
    %cst_72 = arith.constant dense<0.000000e+00> : vector<8x64xf32>
    %97 = tpu.matmul %96, %94, %cst_72 {dimension_numbers = #tpu.dot_dimension_numbers<[1], [0], [0], [1], [0, 0, 1, 1], [], []>} : vector<8x4xbf16>, vector<4x64xbf16>, vector<8x64xf32> -> vector<8x64xf32>
    %98 = arith.addf %93, %97 : vector<8x64xf32>
    %c0_73 = arith.constant 0 : index
    %c129 = arith.constant 129 : index
    %99 = vector.load %arg10[%c0_73, %c129] : memref<4x320xbf16, #tpu.memory_space<vmem>>, vector<4x64xbf16>
    %cst_74 = arith.constant 0.000000e+00 : bf16
    %100 = vector.shape_cast %18 : vector<1x64xi1> to vector<1x64xi1>
    %101 = vector.broadcast %100 : vector<1x64xi1> to vector<4x64xi1>
    %102 = vector.broadcast %cst_74 : bf16 to vector<4x64xbf16>
    %103 = arith.select %101, %99, %102 : vector<4x64xi1>, vector<4x64xbf16>
    %c5_75 = arith.constant 5 : index
    %c0_76 = arith.constant 0 : index
    %c0_77 = arith.constant 0 : index
    %104 = vector.load %arg4[%c5_75, %c0_76, %c0_77] : memref<9x8x4xbf16, #tpu.memory_space<vmem>>, vector<1x8x4xbf16>
    %105 = vector.shape_cast %104 : vector<1x8x4xbf16> to vector<8x4xbf16>
    %cst_78 = arith.constant dense<0.000000e+00> : vector<8x64xf32>
    %106 = tpu.matmul %105, %103, %cst_78 {dimension_numbers = #tpu.dot_dimension_numbers<[1], [0], [0], [1], [0, 0, 1, 1], [], []>} : vector<8x4xbf16>, vector<4x64xbf16>, vector<8x64xf32> -> vector<8x64xf32>
    %107 = arith.addf %98, %106 : vector<8x64xf32>
    %c0_79 = arith.constant 0 : index
    %c135 = arith.constant 135 : index
    %108 = vector.load %arg10[%c0_79, %c135] : memref<4x320xbf16, #tpu.memory_space<vmem>>, vector<4x64xbf16>
    %cst_80 = arith.constant 0.000000e+00 : bf16
    %109 = vector.shape_cast %9 : vector<1x64xi1> to vector<1x64xi1>
    %110 = vector.broadcast %109 : vector<1x64xi1> to vector<4x64xi1>
    %111 = vector.broadcast %cst_80 : bf16 to vector<4x64xbf16>
    %112 = arith.select %110, %108, %111 : vector<4x64xi1>, vector<4x64xbf16>
    %c6_81 = arith.constant 6 : index
    %c0_82 = arith.constant 0 : index
    %c0_83 = arith.constant 0 : index
    %113 = vector.load %arg4[%c6_81, %c0_82, %c0_83] : memref<9x8x4xbf16, #tpu.memory_space<vmem>>, vector<1x8x4xbf16>
    %114 = vector.shape_cast %113 : vector<1x8x4xbf16> to vector<8x4xbf16>
    %cst_84 = arith.constant dense<0.000000e+00> : vector<8x64xf32>
    %115 = tpu.matmul %114, %112, %cst_84 {dimension_numbers = #tpu.dot_dimension_numbers<[1], [0], [0], [1], [0, 0, 1, 1], [], []>} : vector<8x4xbf16>, vector<4x64xbf16>, vector<8x64xf32> -> vector<8x64xf32>
    %116 = arith.addf %107, %115 : vector<8x64xf32>
    %c0_85 = arith.constant 0 : index
    %c136_86 = arith.constant 136 : index
    %117 = vector.load %arg10[%c0_85, %c136_86] : memref<4x320xbf16, #tpu.memory_space<vmem>>, vector<4x64xbf16>
    %c7_87 = arith.constant 7 : index
    %c0_88 = arith.constant 0 : index
    %c0_89 = arith.constant 0 : index
    %118 = vector.load %arg4[%c7_87, %c0_88, %c0_89] : memref<9x8x4xbf16, #tpu.memory_space<vmem>>, vector<1x8x4xbf16>
    %119 = vector.shape_cast %118 : vector<1x8x4xbf16> to vector<8x4xbf16>
    %cst_90 = arith.constant dense<0.000000e+00> : vector<8x64xf32>
    %120 = tpu.matmul %119, %117, %cst_90 {dimension_numbers = #tpu.dot_dimension_numbers<[1], [0], [0], [1], [0, 0, 1, 1], [], []>} : vector<8x4xbf16>, vector<4x64xbf16>, vector<8x64xf32> -> vector<8x64xf32>
    %121 = arith.addf %116, %120 : vector<8x64xf32>
    %c0_91 = arith.constant 0 : index
    %c137 = arith.constant 137 : index
    %122 = vector.load %arg10[%c0_91, %c137] : memref<4x320xbf16, #tpu.memory_space<vmem>>, vector<4x64xbf16>
    %cst_92 = arith.constant 0.000000e+00 : bf16
    %123 = vector.shape_cast %18 : vector<1x64xi1> to vector<1x64xi1>
    %124 = vector.broadcast %123 : vector<1x64xi1> to vector<4x64xi1>
    %125 = vector.broadcast %cst_92 : bf16 to vector<4x64xbf16>
    %126 = arith.select %124, %122, %125 : vector<4x64xi1>, vector<4x64xbf16>
    %c8 = arith.constant 8 : index
    %c0_93 = arith.constant 0 : index
    %c0_94 = arith.constant 0 : index
    %127 = vector.load %arg4[%c8, %c0_93, %c0_94] : memref<9x8x4xbf16, #tpu.memory_space<vmem>>, vector<1x8x4xbf16>
    %128 = vector.shape_cast %127 : vector<1x8x4xbf16> to vector<8x4xbf16>
    %cst_95 = arith.constant dense<0.000000e+00> : vector<8x64xf32>
    %129 = tpu.matmul %128, %126, %cst_95 {dimension_numbers = #tpu.dot_dimension_numbers<[1], [0], [0], [1], [0, 0, 1, 1], [], []>} : vector<8x4xbf16>, vector<4x64xbf16>, vector<8x64xf32> -> vector<8x64xf32>
    %130 = arith.addf %121, %129 : vector<8x64xf32>
    %cst_96 = arith.constant 1.000000e-01 : f32
    %131 = vector.broadcast %cst_96 : f32 to vector<8x64xf32>
    %132 = arith.mulf %131, %130 : vector<8x64xf32>
    %133 = arith.maximumf %130, %132 : vector<8x64xf32>
    %134 = arith.truncf %133 : vector<8x64xf32> to vector<8x64xbf16>
    %c0_97 = arith.constant 0 : index
    %c128_98 = arith.constant 128 : index
    %135 = vector.load %arg11[%c0_97, %c128_98] : memref<8x320xbf16, #tpu.memory_space<vmem>>, vector<8x64xbf16>
    tpu.vector_store %arg11[%c0_97, %c128_98], %134 {strides = array<i32>} : memref<8x320xbf16, #tpu.memory_space<vmem>>, vector<8x64xbf16>,
    %c0_99 = arith.constant 0 : index
    %c0_100 = arith.constant 0 : index
    %136 = vector.load %arg7[%c0_99, %c0_100] : memref<8x1xf32, #tpu.memory_space<vmem>>, vector<8x1xf32>
    %137 = vector.shape_cast %136 : vector<8x1xf32> to vector<8x1xf32>
    %138 = vector.broadcast %137 : vector<8x1xf32> to vector<8x64xf32>
    %c0_101 = arith.constant 0 : index
    %c119_102 = arith.constant 119 : index
    %139 = vector.load %arg11[%c0_101, %c119_102] : memref<8x320xbf16, #tpu.memory_space<vmem>>, vector<8x64xbf16>
    %cst_103 = arith.constant 0.000000e+00 : bf16
    %140 = vector.shape_cast %9 : vector<1x64xi1> to vector<1x64xi1>
    %141 = vector.broadcast %140 : vector<1x64xi1> to vector<8x64xi1>
    %142 = vector.broadcast %cst_103 : bf16 to vector<8x64xbf16>
    %143 = arith.select %141, %139, %142 : vector<8x64xi1>, vector<8x64xbf16>
    %c0_104 = arith.constant 0 : index
    %c0_105 = arith.constant 0 : index
    %c0_106 = arith.constant 0 : index
    %144 = vector.load %arg6[%c0_104, %c0_105, %c0_106] : memref<9x8x8xbf16, #tpu.memory_space<vmem>>, vector<1x8x8xbf16>
    %145 = vector.shape_cast %144 : vector<1x8x8xbf16> to vector<8x8xbf16>
    %cst_107 = arith.constant dense<0.000000e+00> : vector<8x64xf32>
    %146 = tpu.matmul %145, %143, %cst_107 {dimension_numbers = #tpu.dot_dimension_numbers<[1], [0], [0], [1], [0, 0, 1, 1], [], []>} : vector<8x8xbf16>, vector<8x64xbf16>, vector<8x64xf32> -> vector<8x64xf32>
    %147 = arith.addf %138, %146 : vector<8x64xf32>
    %c0_108 = arith.constant 0 : index
    %c120_109 = arith.constant 120 : index
    %148 = vector.load %arg11[%c0_108, %c120_109] : memref<8x320xbf16, #tpu.memory_space<vmem>>, vector<8x64xbf16>
    %c1_110 = arith.constant 1 : index
    %c0_111 = arith.constant 0 : index
    %c0_112 = arith.constant 0 : index
    %149 = vector.load %arg6[%c1_110, %c0_111, %c0_112] : memref<9x8x8xbf16, #tpu.memory_space<vmem>>, vector<1x8x8xbf16>
    %150 = vector.shape_cast %149 : vector<1x8x8xbf16> to vector<8x8xbf16>
    %cst_113 = arith.constant dense<0.000000e+00> : vector<8x64xf32>
    %151 = tpu.matmul %150, %148, %cst_113 {dimension_numbers = #tpu.dot_dimension_numbers<[1], [0], [0], [1], [0, 0, 1, 1], [], []>} : vector<8x8xbf16>, vector<8x64xbf16>, vector<8x64xf32> -> vector<8x64xf32>
    %152 = arith.addf %147, %151 : vector<8x64xf32>
    %c0_114 = arith.constant 0 : index
    %c121_115 = arith.constant 121 : index
    %153 = vector.load %arg11[%c0_114, %c121_115] : memref<8x320xbf16, #tpu.memory_space<vmem>>, vector<8x64xbf16>
    %cst_116 = arith.constant 0.000000e+00 : bf16
    %154 = vector.shape_cast %18 : vector<1x64xi1> to vector<1x64xi1>
    %155 = vector.broadcast %154 : vector<1x64xi1> to vector<8x64xi1>
    %156 = vector.broadcast %cst_116 : bf16 to vector<8x64xbf16>
    %157 = arith.select %155, %153, %156 : vector<8x64xi1>, vector<8x64xbf16>
    %c2_117 = arith.constant 2 : index
    %c0_118 = arith.constant 0 : index
    %c0_119 = arith.constant 0 : index
    %158 = vector.load %arg6[%c2_117, %c0_118, %c0_119] : memref<9x8x8xbf16, #tpu.memory_space<vmem>>, vector<1x8x8xbf16>
    %159 = vector.shape_cast %158 : vector<1x8x8xbf16> to vector<8x8xbf16>
    %cst_120 = arith.constant dense<0.000000e+00> : vector<8x64xf32>
    %160 = tpu.matmul %159, %157, %cst_120 {dimension_numbers = #tpu.dot_dimension_numbers<[1], [0], [0], [1], [0, 0, 1, 1], [], []>} : vector<8x8xbf16>, vector<8x64xbf16>, vector<8x64xf32> -> vector<8x64xf32>
    %161 = arith.addf %152, %160 : vector<8x64xf32>
    %c0_121 = arith.constant 0 : index
    %c127_122 = arith.constant 127 : index
    %162 = vector.load %arg11[%c0_121, %c127_122] : memref<8x320xbf16, #tpu.memory_space<vmem>>, vector<8x64xbf16>
    %cst_123 = arith.constant 0.000000e+00 : bf16
    %163 = vector.shape_cast %9 : vector<1x64xi1> to vector<1x64xi1>
    %164 = vector.broadcast %163 : vector<1x64xi1> to vector<8x64xi1>
    %165 = vector.broadcast %cst_123 : bf16 to vector<8x64xbf16>
    %166 = arith.select %164, %162, %165 : vector<8x64xi1>, vector<8x64xbf16>
    %c3_124 = arith.constant 3 : index
    %c0_125 = arith.constant 0 : index
    %c0_126 = arith.constant 0 : index
    %167 = vector.load %arg6[%c3_124, %c0_125, %c0_126] : memref<9x8x8xbf16, #tpu.memory_space<vmem>>, vector<1x8x8xbf16>
    %168 = vector.shape_cast %167 : vector<1x8x8xbf16> to vector<8x8xbf16>
    %cst_127 = arith.constant dense<0.000000e+00> : vector<8x64xf32>
    %169 = tpu.matmul %168, %166, %cst_127 {dimension_numbers = #tpu.dot_dimension_numbers<[1], [0], [0], [1], [0, 0, 1, 1], [], []>} : vector<8x8xbf16>, vector<8x64xbf16>, vector<8x64xf32> -> vector<8x64xf32>
    %170 = arith.addf %161, %169 : vector<8x64xf32>
    %c0_128 = arith.constant 0 : index
    %c128_129 = arith.constant 128 : index
    %171 = vector.load %arg11[%c0_128, %c128_129] : memref<8x320xbf16, #tpu.memory_space<vmem>>, vector<8x64xbf16>
    %c4_130 = arith.constant 4 : index
    %c0_131 = arith.constant 0 : index
    %c0_132 = arith.constant 0 : index
    %172 = vector.load %arg6[%c4_130, %c0_131, %c0_132] : memref<9x8x8xbf16, #tpu.memory_space<vmem>>, vector<1x8x8xbf16>
    %173 = vector.shape_cast %172 : vector<1x8x8xbf16> to vector<8x8xbf16>
    %cst_133 = arith.constant dense<0.000000e+00> : vector<8x64xf32>
    %174 = tpu.matmul %173, %171, %cst_133 {dimension_numbers = #tpu.dot_dimension_numbers<[1], [0], [0], [1], [0, 0, 1, 1], [], []>} : vector<8x8xbf16>, vector<8x64xbf16>, vector<8x64xf32> -> vector<8x64xf32>
    %175 = arith.addf %170, %174 : vector<8x64xf32>
    %c0_134 = arith.constant 0 : index
    %c129_135 = arith.constant 129 : index
    %176 = vector.load %arg11[%c0_134, %c129_135] : memref<8x320xbf16, #tpu.memory_space<vmem>>, vector<8x64xbf16>
    %cst_136 = arith.constant 0.000000e+00 : bf16
    %177 = vector.shape_cast %18 : vector<1x64xi1> to vector<1x64xi1>
    %178 = vector.broadcast %177 : vector<1x64xi1> to vector<8x64xi1>
    %179 = vector.broadcast %cst_136 : bf16 to vector<8x64xbf16>
    %180 = arith.select %178, %176, %179 : vector<8x64xi1>, vector<8x64xbf16>
    %c5_137 = arith.constant 5 : index
    %c0_138 = arith.constant 0 : index
    %c0_139 = arith.constant 0 : index
    %181 = vector.load %arg6[%c5_137, %c0_138, %c0_139] : memref<9x8x8xbf16, #tpu.memory_space<vmem>>, vector<1x8x8xbf16>
    %182 = vector.shape_cast %181 : vector<1x8x8xbf16> to vector<8x8xbf16>
    %cst_140 = arith.constant dense<0.000000e+00> : vector<8x64xf32>
    %183 = tpu.matmul %182, %180, %cst_140 {dimension_numbers = #tpu.dot_dimension_numbers<[1], [0], [0], [1], [0, 0, 1, 1], [], []>} : vector<8x8xbf16>, vector<8x64xbf16>, vector<8x64xf32> -> vector<8x64xf32>
    %184 = arith.addf %175, %183 : vector<8x64xf32>
    %c0_141 = arith.constant 0 : index
    %c135_142 = arith.constant 135 : index
    %185 = vector.load %arg11[%c0_141, %c135_142] : memref<8x320xbf16, #tpu.memory_space<vmem>>, vector<8x64xbf16>
    %cst_143 = arith.constant 0.000000e+00 : bf16
    %186 = vector.shape_cast %9 : vector<1x64xi1> to vector<1x64xi1>
    %187 = vector.broadcast %186 : vector<1x64xi1> to vector<8x64xi1>
    %188 = vector.broadcast %cst_143 : bf16 to vector<8x64xbf16>
    %189 = arith.select %187, %185, %188 : vector<8x64xi1>, vector<8x64xbf16>
    %c6_144 = arith.constant 6 : index
    %c0_145 = arith.constant 0 : index
    %c0_146 = arith.constant 0 : index
    %190 = vector.load %arg6[%c6_144, %c0_145, %c0_146] : memref<9x8x8xbf16, #tpu.memory_space<vmem>>, vector<1x8x8xbf16>
    %191 = vector.shape_cast %190 : vector<1x8x8xbf16> to vector<8x8xbf16>
    %cst_147 = arith.constant dense<0.000000e+00> : vector<8x64xf32>
    %192 = tpu.matmul %191, %189, %cst_147 {dimension_numbers = #tpu.dot_dimension_numbers<[1], [0], [0], [1], [0, 0, 1, 1], [], []>} : vector<8x8xbf16>, vector<8x64xbf16>, vector<8x64xf32> -> vector<8x64xf32>
    %193 = arith.addf %184, %192 : vector<8x64xf32>
    %c0_148 = arith.constant 0 : index
    %c136_149 = arith.constant 136 : index
    %194 = vector.load %arg11[%c0_148, %c136_149] : memref<8x320xbf16, #tpu.memory_space<vmem>>, vector<8x64xbf16>
    %c7_150 = arith.constant 7 : index
    %c0_151 = arith.constant 0 : index
    %c0_152 = arith.constant 0 : index
    %195 = vector.load %arg6[%c7_150, %c0_151, %c0_152] : memref<9x8x8xbf16, #tpu.memory_space<vmem>>, vector<1x8x8xbf16>
    %196 = vector.shape_cast %195 : vector<1x8x8xbf16> to vector<8x8xbf16>
    %cst_153 = arith.constant dense<0.000000e+00> : vector<8x64xf32>
    %197 = tpu.matmul %196, %194, %cst_153 {dimension_numbers = #tpu.dot_dimension_numbers<[1], [0], [0], [1], [0, 0, 1, 1], [], []>} : vector<8x8xbf16>, vector<8x64xbf16>, vector<8x64xf32> -> vector<8x64xf32>
    %198 = arith.addf %193, %197 : vector<8x64xf32>
    %c0_154 = arith.constant 0 : index
    %c137_155 = arith.constant 137 : index
    %199 = vector.load %arg11[%c0_154, %c137_155] : memref<8x320xbf16, #tpu.memory_space<vmem>>, vector<8x64xbf16>
    %cst_156 = arith.constant 0.000000e+00 : bf16
    %200 = vector.shape_cast %18 : vector<1x64xi1> to vector<1x64xi1>
    %201 = vector.broadcast %200 : vector<1x64xi1> to vector<8x64xi1>
    %202 = vector.broadcast %cst_156 : bf16 to vector<8x64xbf16>
    %203 = arith.select %201, %199, %202 : vector<8x64xi1>, vector<8x64xbf16>
    %c8_157 = arith.constant 8 : index
    %c0_158 = arith.constant 0 : index
    %c0_159 = arith.constant 0 : index
    %204 = vector.load %arg6[%c8_157, %c0_158, %c0_159] : memref<9x8x8xbf16, #tpu.memory_space<vmem>>, vector<1x8x8xbf16>
    %205 = vector.shape_cast %204 : vector<1x8x8xbf16> to vector<8x8xbf16>
    %cst_160 = arith.constant dense<0.000000e+00> : vector<8x64xf32>
    %206 = tpu.matmul %205, %203, %cst_160 {dimension_numbers = #tpu.dot_dimension_numbers<[1], [0], [0], [1], [0, 0, 1, 1], [], []>} : vector<8x8xbf16>, vector<8x64xbf16>, vector<8x64xf32> -> vector<8x64xf32>
    %207 = arith.addf %198, %206 : vector<8x64xf32>
    %cst_161 = arith.constant 1.000000e-01 : f32
    %208 = vector.broadcast %cst_161 : f32 to vector<8x64xf32>
    %209 = arith.mulf %208, %207 : vector<8x64xf32>
    %210 = arith.maximumf %207, %209 : vector<8x64xf32>
    %c0_162 = arith.constant 0 : index
    %c0_163 = arith.constant 0 : index
    %c0_164 = arith.constant 0 : index
    %211 = vector.load %arg8[%c0_162, %c0_163, %c0_164] : memref<1x8x64xf32, #tpu.memory_space<vmem>>, vector<1x8x64xf32>
    %212 = vector.shape_cast %211 : vector<1x8x64xf32> to vector<8x64xf32>
    %213 = vector.shape_cast %210 : vector<8x64xf32> to vector<1x8x64xf32>
    tpu.vector_store %arg8[%c0_162, %c0_163, %c0_164], %213 {strides = array<i32>} : memref<1x8x64xf32, #tpu.memory_space<vmem>>, vector<1x8x64xf32>,
    return
  }
  func.func @transform_0(%arg0: i32) -> (i32, i32, i32) {
    %c0_i32 = arith.constant 0 : i32
    %c0_i32_0 = arith.constant 0 : i32
    %c0_i32_1 = arith.constant 0 : i32
    return %arg0, %c0_i32, %c0_i32_0 : i32, i32, i32
  }
  func.func @transform_1(%arg0: i32) -> (i32, i32) {
    %c0_i32 = arith.constant 0 : i32
    %c0_i32_0 = arith.constant 0 : i32
    %c0_i32_1 = arith.constant 0 : i32
    return %c0_i32, %c0_i32_0 : i32, i32
  }
  func.func @transform_2(%arg0: i32) -> (i32, i32) {
    %c0_i32 = arith.constant 0 : i32
    %c0_i32_0 = arith.constant 0 : i32
    %c0_i32_1 = arith.constant 0 : i32
    return %c0_i32, %c0_i32_0 : i32, i32
  }
  func.func @transform_3(%arg0: i32) -> (i32, i32, i32) {
    %c0_i32 = arith.constant 0 : i32
    %c0_i32_0 = arith.constant 0 : i32
    %c0_i32_1 = arith.constant 0 : i32
    %c0_i32_2 = arith.constant 0 : i32
    return %c0_i32, %c0_i32_0, %c0_i32_1 : i32, i32, i32
  }
  func.func @transform_4(%arg0: i32) -> (i32, i32) {
    %c0_i32 = arith.constant 0 : i32
    %c0_i32_0 = arith.constant 0 : i32
    %c0_i32_1 = arith.constant 0 : i32
    return %c0_i32, %c0_i32_0 : i32, i32
  }
  func.func @transform_5(%arg0: i32) -> (i32, i32, i32) {
    %c0_i32 = arith.constant 0 : i32
    %c0_i32_0 = arith.constant 0 : i32
    %c0_i32_1 = arith.constant 0 : i32
    %c0_i32_2 = arith.constant 0 : i32
    return %c0_i32, %c0_i32_0, %c0_i32_1 : i32, i32, i32
  }
  func.func @transform_6(%arg0: i32) -> (i32, i32) {
    %c0_i32 = arith.constant 0 : i32
    %c0_i32_0 = arith.constant 0 : i32
    %c0_i32_1 = arith.constant 0 : i32
    return %c0_i32, %c0_i32_0 : i32, i32
  }
  func.func @transform_7(%arg0: i32) -> (i32, i32, i32) {
    %c0_i32 = arith.constant 0 : i32
    %c0_i32_0 = arith.constant 0 : i32
    %c0_i32_1 = arith.constant 0 : i32
    return %arg0, %c0_i32, %c0_i32_0 : i32, i32, i32
  }
}

</mosaic_0001>

<llo_original>
// kernel: down_forward.1
$region0: #{down_forward.1}
  #allocation0 [shape = 'u32[]', space=smem, size = 0x4, offset = 0x4, fixed_abs, tag = 'smem constant byte address 0x4 - core index']
  #allocation1 [shape = 'u32[144,128]{1,0:T(1,128)}', space=vmem, size = 0x12000, scoped, tag = 'internal scratch']
  #allocation2 [shape = 'f32[32,8]{1,0:T(8,128)}', space=vmem, size = 0x4000, scoped, tag = 'scratch operand']
  #allocation3 [shape = 'bf16[4,320]{1,0:T(4,128)(2,1)}', space=vmem, size = 0xc00, scoped, tag = 'scratch operand']
  #allocation4 [shape = 'bf16[8,320]{1,0:T(8,128)(2,1)}', space=vmem, size = 0x1800, scoped, tag = 'scratch operand']
  %s0 = inlined_call_operand.vmem [shape: f32[2,32,32], index: 0, kind: input, shape index: {}]
  %s1 = inlined_call_operand.vmem [shape: f32[16,8], index: 1, kind: input, shape index: {}]
  %s2 = inlined_call_operand.vmem [shape: s32[1,64], index: 2, kind: input, shape index: {}]
  %s3 = inlined_call_operand.vmem [shape: bf16[9,8,4], index: 3, kind: input, shape index: {}]
  %s4 = inlined_call_operand.vmem [shape: f32[8,1], index: 4, kind: input, shape index: {}]
  %s5 = inlined_call_operand.vmem [shape: bf16[9,8,8], index: 5, kind: input, shape index: {}]
  %s6 = inlined_call_operand.vmem [shape: f32[8,1], index: 6, kind: input, shape index: {}]
  %s7 = inlined_call_operand.vmem [shape: f32[2,8,64], index: 7, kind: output, shape index: {}]
  %s8 = sld [smem:[#allocation0]]
  $region61: #{down_forward.1} parent=0
    _
  %s10 = ssub.s32 1, %s8
  %s11 = scalar_select 0, %s10, %s8
  loop: start=0, step=1, limit=4
  $region2: #{down_forward.1} parent=0 // loop_pre_header
    _
  $region3: #{down_forward.1} parent=0 // loop_header
    %s13 = sphi 0, %s17
    %p14 = scmp.ge.s32.totalorder %s13, 4
    %s23 = sphi 0, %s25
    %s26 = sphi 0, %s23
    %s27 = sphi 0, %s26
    %s43 = sphi 0, %s27
    %s47 = sphi 0, %s47
    %s49 = sphi 0, %s47
    %s50 = sphi 0, %s49
    %s64 = sphi 0, %s50
    %s68 = sphi 0, %s68
    %s70 = sphi 0, %s68
    %s71 = sphi 0, %s70
    %s85 = sphi 0, %s71
    %s89 = sphi 0, %s89
    %s91 = sphi 0, %s89
    %s92 = sphi 0, %s91
    %s106 = sphi 0, %s92
    %s110 = sphi 0, %s110
    %s112 = sphi 0, %s110
    %s113 = sphi 0, %s112
    %s127 = sphi 0, %s113
    %s131 = sphi 0, %s131
    %s133 = sphi 0, %s131
    %s134 = sphi 0, %s133
    %s148 = sphi 0, %s134
    %s152 = sphi 0, %s152
    %s154 = sphi 0, %s152
    %s155 = sphi 0, %s154
    %s169 = sphi 0, %s155
    %s175 = sphi 0, %s177
    %s178 = sphi 0, %s175
    %s179 = sphi 0, %s178
    %s195 = sphi 0, %s179
  $region4: #{down_forward.1} parent=0 // loop_header_branch
    %16 = sbr.rel (%p14) target = $region8
  $region5: #{down_forward.1} parent=0 // loop_body
    %s18 = ssub.s32 %s13, 1
    %s19 = ssub.s32 %s13, 2
    %s20 = sadd.s32 %s13, 1
    %s21 = ssub.s32 %s13, %s20
    %p22 = scmp.eq.s32.totalorder %s21, 0
    %s24 = sadd.s32 %s23, 1
    %s25 = scalar_select %p22, %s23, %s24
    %p28 = pneg %p22
    %p29 = scmp.eq.s32.totalorder %s13, 1
    %p30 = por %p28, %p29
    %p31 = scmp.ne.s32.totalorder %s23, %s26
    %p32 = scmp.eq.s32.totalorder %s13, 0
    %p33 = por %p31, %p32
    %p34 = scmp.ne.s32.totalorder %s23, %s26
    %p35 = scmp.eq.s32.totalorder %s18, 1
    %p36 = por %p34, %p35
    %p37 = scmp.ne.s32.totalorder %s26, %s27
    %p38 = scmp.eq.s32.totalorder %s18, 0
    %p39 = por %p37, %p38
    %p40 = scmp.ne.s32.totalorder %s26, %s27
    %p41 = scmp.eq.s32.totalorder %s19, 1
    %p42 = por %p40, %p41
    %p44 = scmp.ne.s32.totalorder %s27, %s43
    %p45 = scmp.eq.s32.totalorder %s19, 0
    %p46 = por %p44, %p45
    %s48 = sadd.s32 %s47, 1
    %p51 = scmp.eq.s32.totalorder %s13, 1
    %p52 = scmp.ne.s32.totalorder %s47, %s49
    %p53 = scmp.eq.s32.totalorder %s13, 0
    %p54 = por %p52, %p53
    %p55 = scmp.ne.s32.totalorder %s47, %s49
    %p56 = scmp.eq.s32.totalorder %s18, 1
    %p57 = por %p55, %p56
    %p58 = scmp.ne.s32.totalorder %s49, %s50
    %p59 = scmp.eq.s32.totalorder %s18, 0
    %p60 = por %p58, %p59
    %p61 = scmp.ne.s32.totalorder %s49, %s50
    %p62 = scmp.eq.s32.totalorder %s19, 1
    %p63 = por %p61, %p62
    %p65 = scmp.ne.s32.totalorder %s50, %s64
    %p66 = scmp.eq.s32.totalorder %s19, 0
    %p67 = por %p65, %p66
    %s69 = sadd.s32 %s68, 1
    %p72 = scmp.eq.s32.totalorder %s13, 1
    %p73 = scmp.ne.s32.totalorder %s68, %s70
    %p74 = scmp.eq.s32.totalorder %s13, 0
    %p75 = por %p73, %p74
    %p76 = scmp.ne.s32.totalorder %s68, %s70
    %p77 = scmp.eq.s32.totalorder %s18, 1
    %p78 = por %p76, %p77
    %p79 = scmp.ne.s32.totalorder %s70, %s71
    %p80 = scmp.eq.s32.totalorder %s18, 0
    %p81 = por %p79, %p80
    %p82 = scmp.ne.s32.totalorder %s70, %s71
    %p83 = scmp.eq.s32.totalorder %s19, 1
    %p84 = por %p82, %p83
    %p86 = scmp.ne.s32.totalorder %s71, %s85
    %p87 = scmp.eq.s32.totalorder %s19, 0
    %p88 = por %p86, %p87
    %s90 = sadd.s32 %s89, 1
    %p93 = scmp.eq.s32.totalorder %s13, 1
    %p94 = scmp.ne.s32.totalorder %s89, %s91
    %p95 = scmp.eq.s32.totalorder %s13, 0
    %p96 = por %p94, %p95
    %p97 = scmp.ne.s32.totalorder %s89, %s91
    %p98 = scmp.eq.s32.totalorder %s18, 1
    %p99 = por %p97, %p98
    %p100 = scmp.ne.s32.totalorder %s91, %s92
    %p101 = scmp.eq.s32.totalorder %s18, 0
    %p102 = por %p100, %p101
    %p103 = scmp.ne.s32.totalorder %s91, %s92
    %p104 = scmp.eq.s32.totalorder %s19, 1
    %p105 = por %p103, %p104
    %p107 = scmp.ne.s32.totalorder %s92, %s106
    %p108 = scmp.eq.s32.totalorder %s19, 0
    %p109 = por %p107, %p108
    %s111 = sadd.s32 %s110, 1
    %p114 = scmp.eq.s32.totalorder %s13, 1
    %p115 = scmp.ne.s32.totalorder %s110, %s112
    %p116 = scmp.eq.s32.totalorder %s13, 0
    %p117 = por %p115, %p116
    %p118 = scmp.ne.s32.totalorder %s110, %s112
    %p119 = scmp.eq.s32.totalorder %s18, 1
    %p120 = por %p118, %p119
    %p121 = scmp.ne.s32.totalorder %s112, %s113
    %p122 = scmp.eq.s32.totalorder %s18, 0
    %p123 = por %p121, %p122
    %p124 = scmp.ne.s32.totalorder %s112, %s113
    %p125 = scmp.eq.s32.totalorder %s19, 1
    %p126 = por %p124, %p125
    %p128 = scmp.ne.s32.totalorder %s113, %s127
    %p129 = scmp.eq.s32.totalorder %s19, 0
    %p130 = por %p128, %p129
    %s132 = sadd.s32 %s131, 1
    %p135 = scmp.eq.s32.totalorder %s13, 1
    %p136 = scmp.ne.s32.totalorder %s131, %s133
    %p137 = scmp.eq.s32.totalorder %s13, 0
    %p138 = por %p136, %p137
    %p139 = scmp.ne.s32.totalorder %s131, %s133
    %p140 = scmp.eq.s32.totalorder %s18, 1
    %p141 = por %p139, %p140
    %p142 = scmp.ne.s32.totalorder %s133, %s134
    %p143 = scmp.eq.s32.totalorder %s18, 0
    %p144 = por %p142, %p143
    %p145 = scmp.ne.s32.totalorder %s133, %s134
    %p146 = scmp.eq.s32.totalorder %s19, 1
    %p147 = por %p145, %p146
    %p149 = scmp.ne.s32.totalorder %s134, %s148
    %p150 = scmp.eq.s32.totalorder %s19, 0
    %p151 = por %p149, %p150
    %s153 = sadd.s32 %s152, 1
    %p156 = scmp.eq.s32.totalorder %s13, 1
    %p157 = scmp.ne.s32.totalorder %s152, %s154
    %p158 = scmp.eq.s32.totalorder %s13, 0
    %p159 = por %p157, %p158
    %p160 = scmp.ne.s32.totalorder %s152, %s154
    %p161 = scmp.eq.s32.totalorder %s18, 1
    %p162 = por %p160, %p161
    %p163 = scmp.ne.s32.totalorder %s154, %s155
    %p164 = scmp.eq.s32.totalorder %s18, 0
    %p165 = por %p163, %p164
    %p166 = scmp.ne.s32.totalorder %s154, %s155
    %p167 = scmp.eq.s32.totalorder %s19, 1
    %p168 = por %p166, %p167
    %p170 = scmp.ne.s32.totalorder %s155, %s169
    %p171 = scmp.eq.s32.totalorder %s19, 0
    %p172 = por %p170, %p171
    %s173 = ssub.s32 %s13, %s20
    %p174 = scmp.eq.s32.totalorder %s173, 0
    %s176 = sadd.s32 %s175, 1
    %s177 = scalar_select %p174, %s175, %s176
    %p180 = pneg %p174
    %p181 = scmp.eq.s32.totalorder %s13, 1
    %p182 = por %p180, %p181
    %p183 = scmp.ne.s32.totalorder %s175, %s178
    %p184 = scmp.eq.s32.totalorder %s13, 0
    %p185 = por %p183, %p184
    %p186 = scmp.ne.s32.totalorder %s175, %s178
    %p187 = scmp.eq.s32.totalorder %s18, 1
    %p188 = por %p186, %p187
    %p189 = scmp.ne.s32.totalorder %s178, %s179
    %p190 = scmp.eq.s32.totalorder %s18, 0
    %p191 = por %p189, %p190
    %p192 = scmp.ne.s32.totalorder %s178, %s179
    %p193 = scmp.eq.s32.totalorder %s19, 1
    %p194 = por %p192, %p193
    %p196 = scmp.ne.s32.totalorder %s179, %s195
    %p197 = scmp.eq.s32.totalorder %s19, 0
    %p198 = por %p196, %p197
    %p199 = scmp.le.s32.totalorder 1, %s13
    %p200 = scmp.lt.s32.totalorder %s13, 3
    %p201 = pnand %p199, %p200
    %p202 = pneg %p201
    // Predicated region
    $region9: #{down_forward.1} parent=5 // pred_check
      _
    $region10: #{down_forward.1} parent=5 // pred_check_branch
      %204 = sbr.rel (%p201) target = $region12
    $region11: #{down_forward.1} parent=5 // pred_region
      %s205 = ssub.s32 %s13, 1
      // Predicated region
      $region13: #{down_forward.1} parent=11 // pred_check
        %p206 = pneg %p60
      $region14: #{down_forward.1} parent=11 // pred_check_branch
        %208 = sbr.rel (%p206) target = $region16
      $region15: #{down_forward.1} parent=11 // pred_region
        _
      $region16: #{down_forward.1} parent=11 // pred_fallthru
        _
      // Predicated region
      $region17: #{down_forward.1} parent=11 // pred_check
        %p209 = pneg %p81
      $region18: #{down_forward.1} parent=11 // pred_check_branch
        %211 = sbr.rel (%p209) target = $region20
      $region19: #{down_forward.1} parent=11 // pred_region
        _
      $region20: #{down_forward.1} parent=11 // pred_fallthru
        _
      // Predicated region
      $region21: #{down_forward.1} parent=11 // pred_check
        %p212 = pneg %p102
      $region22: #{down_forward.1} parent=11 // pred_check_branch
        %214 = sbr.rel (%p212) target = $region24
      $region23: #{down_forward.1} parent=11 // pred_region
        _
      $region24: #{down_forward.1} parent=11 // pred_fallthru
        _
      // Predicated region
      $region25: #{down_forward.1} parent=11 // pred_check
        %p215 = pneg %p123
      $region26: #{down_forward.1} parent=11 // pred_check_branch
        %217 = sbr.rel (%p215) target = $region28
      $region27: #{down_forward.1} parent=11 // pred_region
        _
      $region28: #{down_forward.1} parent=11 // pred_fallthru
        _
      // Predicated region
      $region29: #{down_forward.1} parent=11 // pred_check
        %p218 = pneg %p144
      $region30: #{down_forward.1} parent=11 // pred_check_branch
        %220 = sbr.rel (%p218) target = $region32
      $region31: #{down_forward.1} parent=11 // pred_region
        _
      $region32: #{down_forward.1} parent=11 // pred_fallthru
        _
      // Predicated region
      $region33: #{down_forward.1} parent=11 // pred_check
        %p221 = pneg %p165
      $region34: #{down_forward.1} parent=11 // pred_check_branch
        %223 = sbr.rel (%p221) target = $region36
      $region35: #{down_forward.1} parent=11 // pred_region
        _
      $region36: #{down_forward.1} parent=11 // pred_fallthru
        _
    $region12: #{down_forward.1} parent=5 // pred_fallthru
      _
    %p224 = scmp.lt.s32.totalorder %s13, 2
    // Predicated region
    $region37: #{down_forward.1} parent=5 // pred_check
      %p225 = pneg %p224
    $region38: #{down_forward.1} parent=5 // pred_check_branch
      %227 = sbr.rel (%p225) target = $region40
    $region39: #{down_forward.1} parent=5 // pred_region
      // Predicated region
      $region41: #{down_forward.1} parent=39 // pred_check
        %p228 = pneg %p33
      $region42: #{down_forward.1} parent=39 // pred_check_branch
        %230 = sbr.rel (%p228) target = $region44
      $region43: #{down_forward.1} parent=39 // pred_region
        %p231 = scmp.lt.s32.totalorder %s13, 1
        %s232 = scalar_select %p231, %s13, 1
        %s233 = smul.addr %s232, 4
        %s234 = smul.addr %s233, 8
        %s235 = scalar_lea.vmem %s0, %s234
      $region44: #{down_forward.1} parent=39 // pred_fallthru
        _
    $region40: #{down_forward.1} parent=5 // pred_fallthru
      _
    %p236 = scmp.le.s32.totalorder 1, %s13
    %p237 = scmp.lt.s32.totalorder %s13, 3
    %p238 = pnand %p236, %p237
    %p239 = pneg %p238
    // Predicated region
    $region45: #{down_forward.1} parent=5 // pred_check
      _
    $region46: #{down_forward.1} parent=5 // pred_check_branch
      %241 = sbr.rel (%p238) target = $region48
    $region47: #{down_forward.1} parent=5 // pred_region
      %s242 = ssub.s32 %s13, 1
      %p243 = scmp.lt.s32.totalorder %s18, 1
      %s244 = scalar_select %p243, %s18, 1
      %s245 = smul.addr %s244, 4
      %s246 = smul.addr %s245, 8
      %s247 = scalar_lea.vmem %s0, %s246
      %p248 = pneg %p39
      %p249 = pneg %p36
      %p250 = pneg %p60
      %p251 = pneg %p57
      %p252 = pneg %p81
      %p253 = pneg %p78
      %p254 = pneg %p102
      %p255 = pneg %p99
      %p256 = pneg %p123
      %p257 = pneg %p120
      %p258 = pneg %p144
      %p259 = pneg %p141
      %p260 = pneg %p165
      %p261 = pneg %p162
      %p262 = pneg %p191
      %p263 = pneg %p188
      %p264 = scmp.lt.s32.totalorder %s18, 1
      %s265 = scalar_select %p264, %s18, 1
      %s266 = smul.addr %s265, 8
      %s267 = scalar_lea.vmem %s7, %s266
      %p268 = scmp.lt.s32.totalorder %s18, 1
      %s269 = scalar_select %p268, %s18, 1
      %s270 = smul.addr %s269, 4
      %s271 = smul.addr %s270, 8
      %s272 = scalar_lea.vmem %s0, %s271
      %p273 = scmp.lt.s32.totalorder %s18, 1
      %s274 = scalar_select %p273, %s18, 1
      %s275 = smul.addr %s274, 8
      %s276 = scalar_lea.vmem %s7, %s275
      %v280 = vld [vmem:[%s2] sm:$0x1]
      %v281 = vadd.s32 %v280, 4294967295
      %vm282 = vcmp.ge.s32.totalorder %v281, 0
      %vm283 = vcmp.lt.s32.totalorder %v281, 8
      %vm284 = vmand %vm282, %vm283
      %v285 = vadd.s32 %v280, 1
      %vm286 = vcmp.ge.s32.totalorder %v285, 0
      %vm287 = vcmp.lt.s32.totalorder %v285, 8
      %vm288 = vmand %vm286, %vm287
      %289 = vst [vmem:[#allocation3] sm:$0x3] 0
      %vm290 = vcmask 1041920
      %vm291 = vcmask 519170
      %vm292 = vmor %vm291, %vm290
      %293 = vst.msk [vmem:[#allocation3 + $0x2] sm:$0xf] %vm292, 0
      %294 = vst [vmem:[#allocation4] sm:$0xf] 0
      %vm295 = vcmask 1043968
      %vm296 = vcmask 523268
      %vm297 = vmor %vm296, %vm295
      %298 = vst.msk [vmem:[#allocation4 + $0x4] sm:$0xff] %vm297, 0
      %v299 = vld [vmem:[%s272] sm:$0xff]
      %v300 = vld [vmem:[%s272 + $0x8] sm:$0xff]
      %v301 = vld [vmem:[%s272 + $0x10] sm:$0xff]
      %v302 = vld [vmem:[%s272 + $0x18] sm:$0xff]
      %307 = vrot.lane.b32.xlu0 %v299, 112
      %v308 = vpop.permute.xlu0 %307
      %309 = vrot.lane.b32.xlu0 %v300, 112
      %v310 = vpop.permute.xlu0 %309
      %311 = vrot.lane.b32.xlu0 %v301, 112
      %v312 = vpop.permute.xlu0 %311
      %313 = vrot.lane.b32.xlu0 %v302, 112
      %v314 = vpop.permute.xlu0 %313
      %v319 = vadd.f32 %v299, %v308
      %v320 = vadd.f32 %v300, %v310
      %v321 = vadd.f32 %v301, %v312
      %v322 = vadd.f32 %v302, %v314
      %v323 = vld [vmem:[%s1] sm:$0xff]
      %v324 = vld [vmem:[%s1 + $0x8] sm:$0xff]
      %vm325 = vcmask 130048
      %v327 = vsel %vm325, %v319, 0
      %v330 = vsel %vm325, %v320, 0
      %v333 = vsel %vm325, %v321, 0
      %v336 = vsel %vm325, %v322, 0
      %338 = vmatprep.subr.mxu0 0.0
      %339 = vmatpush1.msra.mxu0 0.0
      %340 = vmatprep.subr.mxu0 0.0
      %341 = vmatpush1.msra.mxu0 0.0
      %342 = vmatprep.subr.mxu0 0.0
      %343 = vmatpush1.msra.mxu0 0.0
      %344 = vmatprep.subr.mxu0 0.0
      %345 = vmatpush1.msra.mxu0 0.0
      %346 = vmatprep.subr.mxu0 0.0
      %347 = vmatpush1.msra.mxu0 0.0
      %348 = vmatprep.subr.mxu0 0.0
      %349 = vmatpush1.msra.mxu0 0.0
      %350 = vmatprep.subr.mxu0 0.0
      %351 = vmatpush1.msra.mxu0 0.0
      %352 = vmatprep.subr.mxu0 0.0
      %353 = vmatpush1.msra.mxu0 0.0
      %354 = vmatprep.subr.mxu0 0.0
      %355 = vmatpush1.msra.mxu0 0.0
      %356 = vmatprep.subr.mxu0 0.0
      %357 = vmatpush1.msra.mxu0 0.0
      %358 = vmatprep.subr.mxu0 0.0
      %359 = vmatpush1.msra.mxu0 0.0
      %360 = vmatprep.subr.mxu0 0.0
      %361 = vmatpush1.msra.mxu0 0.0
      %362 = vmatprep.subr.mxu0 0.0
      %363 = vmatpush1.msra.mxu0 0.0
      %364 = vmatprep.subr.mxu0 0.0
      %365 = vmatpush1.msra.mxu0 0.0
      %366 = vmatprep.subr.mxu0 0.0
      %367 = vmatpush1.msra.mxu0 %v324
      %368 = vmatprep.subr.mxu0 0.0
      %369 = vmatpush1.msra.mxu0 %v323
      %370 = vmatprep.subr.mxu0 0.0
      %371 = vmatpush2.msra.mxu0 0.0
      %372 = vmatprep.subr.mxu0 0.0
      %373 = vmatpush2.msra.mxu0 0.0
      %374 = vmatprep.subr.mxu0 0.0
      %375 = vmatpush2.msra.mxu0 0.0
      %376 = vmatprep.subr.mxu0 0.0
      %377 = vmatpush2.msra.mxu0 0.0
      %378 = vmatprep.subr.mxu0 0.0
      %379 = vmatpush2.msra.mxu0 0.0
      %380 = vmatprep.subr.mxu0 0.0
      %381 = vmatpush2.msra.mxu0 0.0
      %382 = vmatprep.subr.mxu0 0.0
      %383 = vmatpush2.msra.mxu0 0.0
      %384 = vmatprep.subr.mxu0 0.0
      %385 = vmatpush2.msra.mxu0 0.0
      %386 = vmatprep.subr.mxu0 0.0
      %387 = vmatpush2.msra.mxu0 0.0
      %388 = vmatprep.subr.mxu0 0.0
      %389 = vmatpush2.msra.mxu0 0.0
      %390 = vmatprep.subr.mxu0 0.0
      %391 = vmatpush2.msra.mxu0 0.0
      %392 = vmatprep.subr.mxu0 0.0
      %393 = vmatpush2.msra.mxu0 0.0
      %394 = vmatprep.subr.mxu0 0.0
      %395 = vmatpush2.msra.mxu0 0.0
      %396 = vmatprep.subr.mxu0 0.0
      %397 = vmatpush2.msra.mxu0 0.0
      %398 = vmatprep.subr.mxu0 0.0
      %399 = vmatpush2.msra.mxu0 0.0
      %400 = vmatprep.subr.mxu0 0.0
      %401 = vmatpush2.msra.mxu0 0.0
      %402 = vmatprep.mubr.f32.mxu0 0.0
      %403 = vmatmul.mubr.f32.gmra.mxu0 %v327
      %v404 = vpop.f32.mrf.mxu0
      %v405 = vadd.f32 0.0, %v404
      %v406 = vpop.f32.mrf.mxu0
      %407 = vmatprep.mubr.f32.mxu0 0.0
      %408 = vmatmul.mubr.f32.gmra.mxu0 %v330
      %v409 = vpop.f32.mrf.mxu0
      %v410 = vadd.f32 0.0, %v409
      %v411 = vpop.f32.mrf.mxu0
      %412 = vmatprep.mubr.f32.mxu0 0.0
      %413 = vmatmul.mubr.f32.gmra.mxu0 %v333
      %v414 = vpop.f32.mrf.mxu0
      %v415 = vadd.f32 0.0, %v414
      %v416 = vpop.f32.mrf.mxu0
      %417 = vmatprep.mubr.f32.mxu0 0.0
      %418 = vmatmul.mubr.f32.gmra.mxu0 %v336
      %v419 = vpop.f32.mrf.mxu0
      %v420 = vadd.f32 0.0, %v419
      %v421 = vpop.f32.mrf.mxu0
      %422 = vdwg.mxu0
      %vm423 = vcmask 64512
      %424 = vst.msk [vmem:[#allocation2] sm:$0xff] %vm423, %v405
      %425 = vst.msk [vmem:[#allocation2 + $0x8] sm:$0xff] %vm423, %v410
      %426 = vst.msk [vmem:[#allocation2 + $0x10] sm:$0xff] %vm423, %v415
      %427 = vst.msk [vmem:[#allocation2 + $0x18] sm:$0xff] %vm423, %v420
      %v428 = vld [vmem:[#allocation2] ss:$8 sm:$0xf]
      %v429 = vpack.c.bf16 %v428, %v428
      %vm430 = vcmask 58368
      %431 = vst.msk [vmem:[#allocation3 + $0x2] sm:$0x3] %vm430, %v429
      %s432 = scalar_lea.vmem [#allocation2], 1
      %v433 = vld [vmem:[%s432] ss:$8 sm:$0xf]
      %v434 = vpack.c.bf16 %v433, %v433
      %v437 = vunpack.c.l.s4 1983009808
      %v438 = vunpack.c.0.s8 %v437
      %v439 = vlaneseq
      %v440 = vshrl.u32 %v439, 7
      %v441 = vsub.s32 %v438, %v440
      %v442 = vrot.slane %v434, %v441
      %443 = vrot.lane.b32.xlu0 %v442, 8
      %v444 = vpop.permute.xlu0 %443
      %vm446 = vcmask 123968
      %447 = vst.msk [vmem:[#allocation3 + $0x2] sm:$0x3] %vm446, %v444
      %s448 = scalar_lea.vmem [#allocation2], 2
      %v449 = vld [vmem:[%s448] ss:$8 sm:$0xf]
      %v450 = vpack.c.bf16 %v449, %v449
      %v453 = vunpack.c.l.s4 1983009808
      %v454 = vunpack.c.0.s8 %v453
      %v455 = vlaneseq
      %v456 = vshrl.u32 %v455, 7
      %v457 = vsub.s32 %v454, %v456
      %v458 = vrot.slane %v450, %v457
      %459 = vrot.lane.b32.xlu0 %v458, 16
      %v460 = vpop.permute.xlu0 %459
      %vm462 = vcmask 189568
      %463 = vst.msk [vmem:[#allocation3 + $0x2] sm:$0x3] %vm462, %v460
      %s464 = scalar_lea.vmem [#allocation2], 3
      %v465 = vld [vmem:[%s464] ss:$8 sm:$0xf]
      %v466 = vpack.c.bf16 %v465, %v465
      %v469 = vunpack.c.l.s4 1983009808
      %v470 = vunpack.c.0.s8 %v469
      %v471 = vlaneseq
      %v472 = vshrl.u32 %v471, 7
      %v473 = vsub.s32 %v470, %v472
      %v474 = vrot.slane %v466, %v473
      %475 = vrot.lane.b32.xlu0 %v474, 24
      %v476 = vpop.permute.xlu0 %475
      %vm478 = vcmask 255168
      %479 = vst.msk [vmem:[#allocation3 + $0x2] sm:$0x3] %vm478, %v476
      %s480 = scalar_lea.vmem [#allocation2], 4
      %v481 = vld [vmem:[%s480] ss:$8 sm:$0xf]
      %v482 = vpack.c.bf16 %v481, %v481
      %v485 = vunpack.c.l.s4 1983009808
      %v486 = vunpack.c.0.s8 %v485
      %v487 = vlaneseq
      %v488 = vshrl.u32 %v487, 7
      %v489 = vsub.s32 %v486, %v488
      %v490 = vrot.slane %v482, %v489
      %491 = vrot.lane.b32.xlu0 %v490, 32
      %v492 = vpop.permute.xlu0 %491
      %vm494 = vcmask 320768
      %495 = vst.msk [vmem:[#allocation3 + $0x2] sm:$0x3] %vm494, %v492
      %s496 = scalar_lea.vmem [#allocation2], 5
      %v497 = vld [vmem:[%s496] ss:$8 sm:$0xf]
      %v498 = vpack.c.bf16 %v497, %v497
      %v501 = vunpack.c.l.s4 1983009808
      %v502 = vunpack.c.0.s8 %v501
      %v503 = vlaneseq
      %v504 = vshrl.u32 %v503, 7
      %v505 = vsub.s32 %v502, %v504
      %v506 = vrot.slane %v498, %v505
      %507 = vrot.lane.b32.xlu0 %v506, 40
      %v508 = vpop.permute.xlu0 %507
      %vm510 = vcmask 386368
      %511 = vst.msk [vmem:[#allocation3 + $0x2] sm:$0x3] %vm510, %v508
      %s512 = scalar_lea.vmem [#allocation2], 6
      %v513 = vld [vmem:[%s512] ss:$8 sm:$0xf]
      %v514 = vpack.c.bf16 %v513, %v513
      %v517 = vunpack.c.l.s4 1983009808
      %v518 = vunpack.c.0.s8 %v517
      %v519 = vlaneseq
      %v520 = vshrl.u32 %v519, 7
      %v521 = vsub.s32 %v518, %v520
      %v522 = vrot.slane %v514, %v521
      %523 = vrot.lane.b32.xlu0 %v522, 48
      %v524 = vpop.permute.xlu0 %523
      %vm526 = vcmask 451968
      %527 = vst.msk [vmem:[#allocation3 + $0x2] sm:$0x3] %vm526, %v524
      %s528 = scalar_lea.vmem [#allocation2], 7
      %v529 = vld [vmem:[%s528] ss:$8 sm:$0xf]
      %v530 = vpack.c.bf16 %v529, %v529
      %v533 = vunpack.c.l.s4 1983009808
      %v534 = vunpack.c.0.s8 %v533
      %v535 = vlaneseq
      %v536 = vshrl.u32 %v535, 7
      %v537 = vsub.s32 %v534, %v536
      %v538 = vrot.slane %v530, %v537
      %539 = vrot.lane.b32.xlu0 %v538, 56
      %v540 = vpop.permute.xlu0 %539
      %vm542 = vcmask 517568
      %543 = vst.msk [vmem:[#allocation3 + $0x2] sm:$0x3] %vm542, %v540
      %v544 = vld [vmem:[%s4] sm:$0xff]
      %546 = vset.pattern.permute.xlu0 0
      %547 = vperm.xlu0 %546, %v544
      %v548 = vpop.permute.xlu0 %547
      %v550 = vld [vmem:[#allocation3] sm:$0xf]
      %v551 = vsel %vm284, 1, 0
      %v552 = vlaneseq
      %v553 = vshrl.u32 %v552, 7
      %v554 = vsub.s32 0, %v553
      %v555 = vrot.slane %v551, %v554
      %vm556 = vcmp.eq.s32.totalorder %v555, 1
      %v557 = vsel %vm556, 1, 0
      %v558 = vpack.c.b16 %v557, %v557
      %vm559 = vcmp.ne.s16.totalorder %v558, 0
      %v560 = vsel %vm559, 65537, 0
      %561 = vrot.lane.b32.xlu0 %v560, 119
      %v562 = vpop.permute.xlu0 %561
      %v563 = vrot.slane %v562, 6
      %vm564 = vcmask 973824
      %v565 = vsel %vm564, %v563, %v562
      %vm566 = vcmp.ne.s16.totalorder %v565, 0
      %v567 = vsel %vm566, %v550, 0
      %v568 = vld [vmem:[%s3] sm:$0xf]
      %v571 = vunpack.c.l.s4 1983009808
      %v572 = vunpack.c.0.s8 %v571
      %v573 = vlaneseq
      %v574 = vshrl.u32 %v573, 7
      %v575 = vsub.s32 %v572, %v574
      %v576 = vrot.slane %v567, %v575
      %v577 = vcombine.high %v576, %v576
      %578 = vrot.lane.b32.xlu0 %v576, 9
      %v579 = vpop.permute.xlu0 %578
      %580 = vrot.lane.b32.xlu0 %v577, 9
      %v581 = vpop.permute.xlu0 %580
      %vm582 = vcmask 72704
      %v583 = vsel %vm582, %v579, %v581
      %vm584 = vcmask 31744
      %v586 = vsel %vm584, %v568, 0
      %vm588 = vcmask 1041408
      %v590 = vsel %vm588, %v583, 0
      %592 = vmatprep.subr.bf16.mxu0 0
      %593 = vmatpush1.bf16.msra.mxu0 0
      %594 = vmatprep.subr.bf16.mxu0 0
      %595 = vmatpush1.bf16.msra.mxu0 0
      %596 = vmatprep.subr.bf16.mxu0 0
      %597 = vmatpush1.bf16.msra.mxu0 0
      %598 = vmatprep.subr.bf16.mxu0 0
      %599 = vmatpush1.bf16.msra.mxu0 0
      %600 = vmatprep.subr.bf16.mxu0 0
      %601 = vmatpush1.bf16.msra.mxu0 0
      %602 = vmatprep.subr.bf16.mxu0 0
      %603 = vmatpush1.bf16.msra.mxu0 0
      %604 = vmatprep.subr.bf16.mxu0 0
      %605 = vmatpush1.bf16.msra.mxu0 0
      %606 = vmatprep.subr.bf16.mxu0 0
      %607 = vmatpush1.bf16.msra.mxu0 %v590
      %608 = vmatprep.subr.bf16.mxu0 0
      %609 = vmatpush2.bf16.msra.mxu0 0
      %610 = vmatprep.subr.bf16.mxu0 0
      %611 = vmatpush2.bf16.msra.mxu0 0
      %612 = vmatprep.subr.bf16.mxu0 0
      %613 = vmatpush2.bf16.msra.mxu0 0
      %614 = vmatprep.subr.bf16.mxu0 0
      %615 = vmatpush2.bf16.msra.mxu0 0
      %616 = vmatprep.subr.bf16.mxu0 0
      %617 = vmatpush2.bf16.msra.mxu0 0
      %618 = vmatprep.subr.bf16.mxu0 0
      %619 = vmatpush2.bf16.msra.mxu0 0
      %620 = vmatprep.subr.bf16.mxu0 0
      %621 = vmatpush2.bf16.msra.mxu0 0
      %622 = vmatprep.subr.bf16.mxu0 0
      %623 = vmatpush2.bf16.msra.mxu0 0
      %624 = vmatprep.mubr.bf16.mxu0 0
      %625 = vmatmul.mubr.bf16.gmra.mxu0 %v586
      %v626 = vpop.f32.mrf.mxu0
      %v627 = vadd.f32 0.0, %v626
      %v628 = vpop.f32.mrf.mxu0
      %v629 = vpop.f32.mrf.mxu0
      %v630 = vpop.f32.mrf.mxu0
      %631 = vdwg.mxu0
      %v632 = vadd.f32 %v548, %v627
      %v633 = vld [vmem:[#allocation3] sm:$0xf]
      %s634 = scalar_lea.vmem %s3, 4
      %v635 = vld [vmem:[%s634] sm:$0xf]
      %v638 = vunpack.c.l.s4 1983009808
      %v639 = vunpack.c.0.s8 %v638
      %v640 = vlaneseq
      %v641 = vshrl.u32 %v640, 7
      %v642 = vsub.s32 %v639, %v641
      %v643 = vrot.slane %v633, %v642
      %v644 = vcombine.high %v643, %v643
      %645 = vrot.lane.b32.xlu0 %v643, 8
      %v646 = vpop.permute.xlu0 %645
      %647 = vrot.lane.b32.xlu0 %v644, 8
      %v648 = vpop.permute.xlu0 %647
      %vm649 = vcmask 64512
      %v650 = vsel %vm649, %v646, %v648
      %v652 = vsel %vm584, %v635, 0
      %v655 = vsel %vm588, %v650, 0
      %657 = vmatprep.subr.bf16.mxu0 0
      %658 = vmatpush1.bf16.msra.mxu0 0
      %659 = vmatprep.subr.bf16.mxu0 0
      %660 = vmatpush1.bf16.msra.mxu0 0
      %661 = vmatprep.subr.bf16.mxu0 0
      %662 = vmatpush1.bf16.msra.mxu0 0
      %663 = vmatprep.subr.bf16.mxu0 0
      %664 = vmatpush1.bf16.msra.mxu0 0
      %665 = vmatprep.subr.bf16.mxu0 0
      %666 = vmatpush1.bf16.msra.mxu0 0
      %667 = vmatprep.subr.bf16.mxu0 0
      %668 = vmatpush1.bf16.msra.mxu0 0
      %669 = vmatprep.subr.bf16.mxu0 0
      %670 = vmatpush1.bf16.msra.mxu0 0
      %671 = vmatprep.subr.bf16.mxu0 0
      %672 = vmatpush1.bf16.msra.mxu0 %v655
      %673 = vmatprep.subr.bf16.mxu0 0
      %674 = vmatpush2.bf16.msra.mxu0 0
      %675 = vmatprep.subr.bf16.mxu0 0
      %676 = vmatpush2.bf16.msra.mxu0 0
      %677 = vmatprep.subr.bf16.mxu0 0
      %678 = vmatpush2.bf16.msra.mxu0 0
      %679 = vmatprep.subr.bf16.mxu0 0
      %680 = vmatpush2.bf16.msra.mxu0 0
      %681 = vmatprep.subr.bf16.mxu0 0
      %682 = vmatpush2.bf16.msra.mxu0 0
      %683 = vmatprep.subr.bf16.mxu0 0
      %684 = vmatpush2.bf16.msra.mxu0 0
      %685 = vmatprep.subr.bf16.mxu0 0
      %686 = vmatpush2.bf16.msra.mxu0 0
      %687 = vmatprep.subr.bf16.mxu0 0
      %688 = vmatpush2.bf16.msra.mxu0 0
      %689 = vmatprep.mubr.bf16.mxu0 0
      %690 = vmatmul.mubr.bf16.gmra.mxu0 %v652
      %v691 = vpop.f32.mrf.mxu0
      %v692 = vadd.f32 0.0, %v691
      %v693 = vpop.f32.mrf.mxu0
      %v694 = vpop.f32.mrf.mxu0
      %v695 = vpop.f32.mrf.mxu0
      %696 = vdwg.mxu0
      %v697 = vadd.f32 %v632, %v692
      %v698 = vld [vmem:[#allocation3] sm:$0xf]
      %v699 = vsel %vm288, 1, 0
      %v700 = vlaneseq
      %v701 = vshrl.u32 %v700, 7
      %v702 = vsub.s32 0, %v701
      %v703 = vrot.slane %v699, %v702
      %vm704 = vcmp.eq.s32.totalorder %v703, 1
      %v705 = vsel %vm704, 1, 0
      %v706 = vpack.c.b16 %v705, %v705
      %vm707 = vcmp.ne.s16.totalorder %v706, 0
      %v708 = vsel %vm707, 65537, 0
      %709 = vrot.lane.b32.xlu0 %v708, 121
      %v710 = vpop.permute.xlu0 %709
      %v711 = vrot.slane %v710, 6
      %vm712 = vcmask 990208
      %v713 = vsel %vm712, %v711, %v710
      %vm714 = vcmp.ne.s16.totalorder %v713, 0
      %v715 = vsel %vm714, %v698, 0
      %s716 = scalar_lea.vmem %s3, 8
      %v717 = vld [vmem:[%s716] sm:$0xf]
      %v720 = vunpack.c.l.s4 1983009808
      %v721 = vunpack.c.0.s8 %v720
      %v722 = vlaneseq
      %v723 = vshrl.u32 %v722, 7
      %v724 = vsub.s32 %v721, %v723
      %v725 = vrot.slane %v715, %v724
      %v726 = vcombine.high %v725, %v725
      %727 = vrot.lane.b32.xlu0 %v725, 7
      %v728 = vpop.permute.xlu0 %727
      %729 = vrot.lane.b32.xlu0 %v726, 7
      %v730 = vpop.permute.xlu0 %729
      %vm731 = vcmask 56320
      %v732 = vsel %vm731, %v728, %v730
      %v734 = vsel %vm584, %v717, 0
      %v737 = vsel %vm588, %v732, 0
      %739 = vmatprep.subr.bf16.mxu0 0
      %740 = vmatpush1.bf16.msra.mxu0 0
      %741 = vmatprep.subr.bf16.mxu0 0
      %742 = vmatpush1.bf16.msra.mxu0 0
      %743 = vmatprep.subr.bf16.mxu0 0
      %744 = vmatpush1.bf16.msra.mxu0 0
      %745 = vmatprep.subr.bf16.mxu0 0
      %746 = vmatpush1.bf16.msra.mxu0 0
      %747 = vmatprep.subr.bf16.mxu0 0
      %748 = vmatpush1.bf16.msra.mxu0 0
      %749 = vmatprep.subr.bf16.mxu0 0
      %750 = vmatpush1.bf16.msra.mxu0 0
      %751 = vmatprep.subr.bf16.mxu0 0
      %752 = vmatpush1.bf16.msra.mxu0 0
      %753 = vmatprep.subr.bf16.mxu0 0
      %754 = vmatpush1.bf16.msra.mxu0 %v737
      %755 = vmatprep.subr.bf16.mxu0 0
      %756 = vmatpush2.bf16.msra.mxu0 0
      %757 = vmatprep.subr.bf16.mxu0 0
      %758 = vmatpush2.bf16.msra.mxu0 0
      %759 = vmatprep.subr.bf16.mxu0 0
      %760 = vmatpush2.bf16.msra.mxu0 0
      %761 = vmatprep.subr.bf16.mxu0 0
      %762 = vmatpush2.bf16.msra.mxu0 0
      %763 = vmatprep.subr.bf16.mxu0 0
      %764 = vmatpush2.bf16.msra.mxu0 0
      %765 = vmatprep.subr.bf16.mxu0 0
      %766 = vmatpush2.bf16.msra.mxu0 0
      %767 = vmatprep.subr.bf16.mxu0 0
      %768 = vmatpush2.bf16.msra.mxu0 0
      %769 = vmatprep.subr.bf16.mxu0 0
      %770 = vmatpush2.bf16.msra.mxu0 0
      %771 = vmatprep.mubr.bf16.mxu0 0
      %772 = vmatmul.mubr.bf16.gmra.mxu0 %v734
      %v773 = vpop.f32.mrf.mxu0
      %v774 = vadd.f32 0.0, %v773
      %v775 = vpop.f32.mrf.mxu0
      %v776 = vpop.f32.mrf.mxu0
      %v777 = vpop.f32.mrf.mxu0
      %778 = vdwg.mxu0
      %v779 = vadd.f32 %v697, %v774
      %v780 = vld [vmem:[#allocation3] sm:$0xf]
      %781 = vrot.lane.b32.xlu0 %v560, 127
      %v782 = vpop.permute.xlu0 %781
      %v783 = vrot.slane %v782, 6
      %vm784 = vcmask 1039360
      %v785 = vsel %vm784, %v783, %v782
      %vm786 = vcmp.ne.s16.totalorder %v785, 0
      %v787 = vsel %vm786, %v780, 0
      %s788 = scalar_lea.vmem %s3, 12
      %v789 = vld [vmem:[%s788] sm:$0xf]
      %v792 = vunpack.c.l.s4 1983009808
      %v793 = vunpack.c.0.s8 %v792
      %v794 = vlaneseq
      %v795 = vshrl.u32 %v794, 7
      %v796 = vsub.s32 %v793, %v795
      %v797 = vrot.slane %v787, %v796
      %v798 = vcombine.high %v797, %v797
      %799 = vrot.lane.b32.xlu0 %v797, 1
      %v800 = vpop.permute.xlu0 %799
      %801 = vrot.lane.b32.xlu0 %v798, 1
      %v802 = vpop.permute.xlu0 %801
      %vm803 = vcmask 7168
      %v804 = vsel %vm803, %v800, %v802
      %v806 = vsel %vm584, %v789, 0
      %v809 = vsel %vm588, %v804, 0
      %811 = vmatprep.subr.bf16.mxu0 0
      %812 = vmatpush1.bf16.msra.mxu0 0
      %813 = vmatprep.subr.bf16.mxu0 0
      %814 = vmatpush1.bf16.msra.mxu0 0
      %815 = vmatprep.subr.bf16.mxu0 0
      %816 = vmatpush1.bf16.msra.mxu0 0
      %817 = vmatprep.subr.bf16.mxu0 0
      %818 = vmatpush1.bf16.msra.mxu0 0
      %819 = vmatprep.subr.bf16.mxu0 0
      %820 = vmatpush1.bf16.msra.mxu0 0
      %821 = vmatprep.subr.bf16.mxu0 0
      %822 = vmatpush1.bf16.msra.mxu0 0
      %823 = vmatprep.subr.bf16.mxu0 0
      %824 = vmatpush1.bf16.msra.mxu0 0
      %825 = vmatprep.subr.bf16.mxu0 0
      %826 = vmatpush1.bf16.msra.mxu0 %v809
      %827 = vmatprep.subr.bf16.mxu0 0
      %828 = vmatpush2.bf16.msra.mxu0 0
      %829 = vmatprep.subr.bf16.mxu0 0
      %830 = vmatpush2.bf16.msra.mxu0 0
      %831 = vmatprep.subr.bf16.mxu0 0
      %832 = vmatpush2.bf16.msra.mxu0 0
      %833 = vmatprep.subr.bf16.mxu0 0
      %834 = vmatpush2.bf16.msra.mxu0 0
      %835 = vmatprep.subr.bf16.mxu0 0
      %836 = vmatpush2.bf16.msra.mxu0 0
      %837 = vmatprep.subr.bf16.mxu0 0
      %838 = vmatpush2.bf16.msra.mxu0 0
      %839 = vmatprep.subr.bf16.mxu0 0
      %840 = vmatpush2.bf16.msra.mxu0 0
      %841 = vmatprep.subr.bf16.mxu0 0
      %842 = vmatpush2.bf16.msra.mxu0 0
      %843 = vmatprep.mubr.bf16.mxu0 0
      %844 = vmatmul.mubr.bf16.gmra.mxu0 %v806
      %v845 = vpop.f32.mrf.mxu0
      %v846 = vadd.f32 0.0, %v845
      %v847 = vpop.f32.mrf.mxu0
      %v848 = vpop.f32.mrf.mxu0
      %v849 = vpop.f32.mrf.mxu0
      %850 = vdwg.mxu0
      %v851 = vadd.f32 %v779, %v846
      %v852 = vld [vmem:[#allocation3 + $0x2] sm:$0x3]
      %s853 = scalar_lea.vmem %s3, 16
      %v854 = vld [vmem:[%s853] sm:$0xf]
      %v856 = vsel %vm584, %v854, 0
      %v859 = vsel %vm588, %v852, 0
      %861 = vmatprep.subr.bf16.mxu0 0
      %862 = vmatpush1.bf16.msra.mxu0 0
      %863 = vmatprep.subr.bf16.mxu0 0
      %864 = vmatpush1.bf16.msra.mxu0 0
      %865 = vmatprep.subr.bf16.mxu0 0
      %866 = vmatpush1.bf16.msra.mxu0 0
      %867 = vmatprep.subr.bf16.mxu0 0
      %868 = vmatpush1.bf16.msra.mxu0 0
      %869 = vmatprep.subr.bf16.mxu0 0
      %870 = vmatpush1.bf16.msra.mxu0 0
      %871 = vmatprep.subr.bf16.mxu0 0
      %872 = vmatpush1.bf16.msra.mxu0 0
      %873 = vmatprep.subr.bf16.mxu0 0
      %874 = vmatpush1.bf16.msra.mxu0 0
      %875 = vmatprep.subr.bf16.mxu0 0
      %876 = vmatpush1.bf16.msra.mxu0 %v859
      %877 = vmatprep.subr.bf16.mxu0 0
      %878 = vmatpush2.bf16.msra.mxu0 0
      %879 = vmatprep.subr.bf16.mxu0 0
      %880 = vmatpush2.bf16.msra.mxu0 0
      %881 = vmatprep.subr.bf16.mxu0 0
      %882 = vmatpush2.bf16.msra.mxu0 0
      %883 = vmatprep.subr.bf16.mxu0 0
      %884 = vmatpush2.bf16.msra.mxu0 0
      %885 = vmatprep.subr.bf16.mxu0 0
      %886 = vmatpush2.bf16.msra.mxu0 0
      %887 = vmatprep.subr.bf16.mxu0 0
      %888 = vmatpush2.bf16.msra.mxu0 0
      %889 = vmatprep.subr.bf16.mxu0 0
      %890 = vmatpush2.bf16.msra.mxu0 0
      %891 = vmatprep.subr.bf16.mxu0 0
      %892 = vmatpush2.bf16.msra.mxu0 0
      %893 = vmatprep.mubr.bf16.mxu0 0
      %894 = vmatmul.mubr.bf16.gmra.mxu0 %v856
      %v895 = vpop.f32.mrf.mxu0
      %v896 = vadd.f32 0.0, %v895
      %v897 = vpop.f32.mrf.mxu0
      %v898 = vpop.f32.mrf.mxu0
      %v899 = vpop.f32.mrf.mxu0
      %900 = vdwg.mxu0
      %v901 = vadd.f32 %v851, %v896
      %902 = vrot.lane.b32.xlu0 %v708, 1
      %v903 = vpop.permute.xlu0 %902
      %vm904 = vcmp.ne.s16.totalorder %v903, 0
      %v905 = vsel %vm904, %v852, 0
      %s906 = scalar_lea.vmem %s3, 20
      %v907 = vld [vmem:[%s906] sm:$0xf]
      %v910 = vunpack.c.l.s4 1983009808
      %v911 = vunpack.c.0.s8 %v910
      %v912 = vlaneseq
      %v913 = vshrl.u32 %v912, 7
      %v914 = vsub.s32 %v911, %v913
      %v915 = vrot.slane %v905, %v914
      %916 = vrot.lane.b32.xlu0 %v915, 127
      %v917 = vpop.permute.xlu0 %916
      %v919 = vsel %vm584, %v907, 0
      %v922 = vsel %vm588, %v917, 0
      %924 = vmatprep.subr.bf16.mxu0 0
      %925 = vmatpush1.bf16.msra.mxu0 0
      %926 = vmatprep.subr.bf16.mxu0 0
      %927 = vmatpush1.bf16.msra.mxu0 0
      %928 = vmatprep.subr.bf16.mxu0 0
      %929 = vmatpush1.bf16.msra.mxu0 0
      %930 = vmatprep.subr.bf16.mxu0 0
      %931 = vmatpush1.bf16.msra.mxu0 0
      %932 = vmatprep.subr.bf16.mxu0 0
      %933 = vmatpush1.bf16.msra.mxu0 0
      %934 = vmatprep.subr.bf16.mxu0 0
      %935 = vmatpush1.bf16.msra.mxu0 0
      %936 = vmatprep.subr.bf16.mxu0 0
      %937 = vmatpush1.bf16.msra.mxu0 0
      %938 = vmatprep.subr.bf16.mxu0 0
      %939 = vmatpush1.bf16.msra.mxu0 %v922
      %940 = vmatprep.subr.bf16.mxu0 0
      %941 = vmatpush2.bf16.msra.mxu0 0
      %942 = vmatprep.subr.bf16.mxu0 0
      %943 = vmatpush2.bf16.msra.mxu0 0
      %944 = vmatprep.subr.bf16.mxu0 0
      %945 = vmatpush2.bf16.msra.mxu0 0
      %946 = vmatprep.subr.bf16.mxu0 0
      %947 = vmatpush2.bf16.msra.mxu0 0
      %948 = vmatprep.subr.bf16.mxu0 0
      %949 = vmatpush2.bf16.msra.mxu0 0
      %950 = vmatprep.subr.bf16.mxu0 0
      %951 = vmatpush2.bf16.msra.mxu0 0
      %952 = vmatprep.subr.bf16.mxu0 0
      %953 = vmatpush2.bf16.msra.mxu0 0
      %954 = vmatprep.subr.bf16.mxu0 0
      %955 = vmatpush2.bf16.msra.mxu0 0
      %956 = vmatprep.mubr.bf16.mxu0 0
      %957 = vmatmul.mubr.bf16.gmra.mxu0 %v919
      %v958 = vpop.f32.mrf.mxu0
      %v959 = vadd.f32 0.0, %v958
      %v960 = vpop.f32.mrf.mxu0
      %v961 = vpop.f32.mrf.mxu0
      %v962 = vpop.f32.mrf.mxu0
      %963 = vdwg.mxu0
      %v964 = vadd.f32 %v901, %v959
      %v965 = vld [vmem:[#allocation3 + $0x2] sm:$0x3]
      %966 = vrot.lane.b32.xlu0 %v560, 7
      %v967 = vpop.permute.xlu0 %966
      %vm968 = vcmp.ne.s16.totalorder %v967, 0
      %v969 = vsel %vm968, %v965, 0
      %s970 = scalar_lea.vmem %s3, 24
      %v971 = vld [vmem:[%s970] sm:$0xf]
      %v974 = vunpack.c.l.s4 1983009808
      %v975 = vunpack.c.0.s8 %v974
      %v976 = vlaneseq
      %v977 = vshrl.u32 %v976, 7
      %v978 = vsub.s32 %v975, %v977
      %v979 = vrot.slane %v969, %v978
      %980 = vrot.lane.b32.xlu0 %v979, 121
      %v981 = vpop.permute.xlu0 %980
      %v983 = vsel %vm584, %v971, 0
      %v986 = vsel %vm588, %v981, 0
      %988 = vmatprep.subr.bf16.mxu0 0
      %989 = vmatpush1.bf16.msra.mxu0 0
      %990 = vmatprep.subr.bf16.mxu0 0
      %991 = vmatpush1.bf16.msra.mxu0 0
      %992 = vmatprep.subr.bf16.mxu0 0
      %993 = vmatpush1.bf16.msra.mxu0 0
      %994 = vmatprep.subr.bf16.mxu0 0
      %995 = vmatpush1.bf16.msra.mxu0 0
      %996 = vmatprep.subr.bf16.mxu0 0
      %997 = vmatpush1.bf16.msra.mxu0 0
      %998 = vmatprep.subr.bf16.mxu0 0
      %999 = vmatpush1.bf16.msra.mxu0 0
      %1000 = vmatprep.subr.bf16.mxu0 0
      %1001 = vmatpush1.bf16.msra.mxu0 0
      %1002 = vmatprep.subr.bf16.mxu0 0
      %1003 = vmatpush1.bf16.msra.mxu0 %v986
      %1004 = vmatprep.subr.bf16.mxu0 0
      %1005 = vmatpush2.bf16.msra.mxu0 0
      %1006 = vmatprep.subr.bf16.mxu0 0
      %1007 = vmatpush2.bf16.msra.mxu0 0
      %1008 = vmatprep.subr.bf16.mxu0 0
      %1009 = vmatpush2.bf16.msra.mxu0 0
      %1010 = vmatprep.subr.bf16.mxu0 0
      %1011 = vmatpush2.bf16.msra.mxu0 0
      %1012 = vmatprep.subr.bf16.mxu0 0
      %1013 = vmatpush2.bf16.msra.mxu0 0
      %1014 = vmatprep.subr.bf16.mxu0 0
      %1015 = vmatpush2.bf16.msra.mxu0 0
      %1016 = vmatprep.subr.bf16.mxu0 0
      %1017 = vmatpush2.bf16.msra.mxu0 0
      %1018 = vmatprep.subr.bf16.mxu0 0
      %1019 = vmatpush2.bf16.msra.mxu0 0
      %1020 = vmatprep.mubr.bf16.mxu0 0
      %1021 = vmatmul.mubr.bf16.gmra.mxu0 %v983
      %v1022 = vpop.f32.mrf.mxu0
      %v1023 = vadd.f32 0.0, %v1022
      %v1024 = vpop.f32.mrf.mxu0
      %v1025 = vpop.f32.mrf.mxu0
      %v1026 = vpop.f32.mrf.mxu0
      %1027 = vdwg.mxu0
      %v1028 = vadd.f32 %v964, %v1023
      %v1029 = vld [vmem:[#allocation3 + $0x2] sm:$0x3]
      %s1030 = scalar_lea.vmem %s3, 28
      %v1031 = vld [vmem:[%s1030] sm:$0xf]
      %v1034 = vunpack.c.l.s4 1983009808
      %v1035 = vunpack.c.0.s8 %v1034
      %v1036 = vlaneseq
      %v1037 = vshrl.u32 %v1036, 7
      %v1038 = vsub.s32 %v1035, %v1037
      %v1039 = vrot.slane %v1029, %v1038
      %1040 = vrot.lane.b32.xlu0 %v1039, 120
      %v1041 = vpop.permute.xlu0 %1040
      %v1043 = vsel %vm584, %v1031, 0
      %v1046 = vsel %vm588, %v1041, 0
      %1048 = vmatprep.subr.bf16.mxu0 0
      %1049 = vmatpush1.bf16.msra.mxu0 0
      %1050 = vmatprep.subr.bf16.mxu0 0
      %1051 = vmatpush1.bf16.msra.mxu0 0
      %1052 = vmatprep.subr.bf16.mxu0 0
      %1053 = vmatpush1.bf16.msra.mxu0 0
      %1054 = vmatprep.subr.bf16.mxu0 0
      %1055 = vmatpush1.bf16.msra.mxu0 0
      %1056 = vmatprep.subr.bf16.mxu0 0
      %1057 = vmatpush1.bf16.msra.mxu0 0
      %1058 = vmatprep.subr.bf16.mxu0 0
      %1059 = vmatpush1.bf16.msra.mxu0 0
      %1060 = vmatprep.subr.bf16.mxu0 0
      %1061 = vmatpush1.bf16.msra.mxu0 0
      %1062 = vmatprep.subr.bf16.mxu0 0
      %1063 = vmatpush1.bf16.msra.mxu0 %v1046
      %1064 = vmatprep.subr.bf16.mxu0 0
      %1065 = vmatpush2.bf16.msra.mxu0 0
      %1066 = vmatprep.subr.bf16.mxu0 0
      %1067 = vmatpush2.bf16.msra.mxu0 0
      %1068 = vmatprep.subr.bf16.mxu0 0
      %1069 = vmatpush2.bf16.msra.mxu0 0
      %1070 = vmatprep.subr.bf16.mxu0 0
      %1071 = vmatpush2.bf16.msra.mxu0 0
      %1072 = vmatprep.subr.bf16.mxu0 0
      %1073 = vmatpush2.bf16.msra.mxu0 0
      %1074 = vmatprep.subr.bf16.mxu0 0
      %1075 = vmatpush2.bf16.msra.mxu0 0
      %1076 = vmatprep.subr.bf16.mxu0 0
      %1077 = vmatpush2.bf16.msra.mxu0 0
      %1078 = vmatprep.subr.bf16.mxu0 0
      %1079 = vmatpush2.bf16.msra.mxu0 0
      %1080 = vmatprep.mubr.bf16.mxu0 0
      %1081 = vmatmul.mubr.bf16.gmra.mxu0 %v1043
      %v1082 = vpop.f32.mrf.mxu0
      %v1083 = vadd.f32 0.0, %v1082
      %v1084 = vpop.f32.mrf.mxu0
      %v1085 = vpop.f32.mrf.mxu0
      %v1086 = vpop.f32.mrf.mxu0
      %1087 = vdwg.mxu0
      %v1088 = vadd.f32 %v1028, %v1083
      %v1089 = vld [vmem:[#allocation3 + $0x2] sm:$0x3]
      %1090 = vrot.lane.b32.xlu0 %v708, 9
      %v1091 = vpop.permute.xlu0 %1090
      %vm1092 = vcmp.ne.s16.totalorder %v1091, 0
      %v1093 = vsel %vm1092, %v1089, 0
      %s1094 = scalar_lea.vmem %s3, 32
      %v1095 = vld [vmem:[%s1094] sm:$0xf]
      %v1098 = vunpack.c.l.s4 1983009808
      %v1099 = vunpack.c.0.s8 %v1098
      %v1100 = vlaneseq
      %v1101 = vshrl.u32 %v1100, 7
      %v1102 = vsub.s32 %v1099, %v1101
      %v1103 = vrot.slane %v1093, %v1102
      %1104 = vrot.lane.b32.xlu0 %v1103, 119
      %v1105 = vpop.permute.xlu0 %1104
      %v1107 = vsel %vm584, %v1095, 0
      %v1110 = vsel %vm588, %v1105, 0
      %1112 = vmatprep.subr.bf16.mxu0 0
      %1113 = vmatpush1.bf16.msra.mxu0 0
      %1114 = vmatprep.subr.bf16.mxu0 0
      %1115 = vmatpush1.bf16.msra.mxu0 0
      %1116 = vmatprep.subr.bf16.mxu0 0
      %1117 = vmatpush1.bf16.msra.mxu0 0
      %1118 = vmatprep.subr.bf16.mxu0 0
      %1119 = vmatpush1.bf16.msra.mxu0 0
      %1120 = vmatprep.subr.bf16.mxu0 0
      %1121 = vmatpush1.bf16.msra.mxu0 0
      %1122 = vmatprep.subr.bf16.mxu0 0
      %1123 = vmatpush1.bf16.msra.mxu0 0
      %1124 = vmatprep.subr.bf16.mxu0 0
      %1125 = vmatpush1.bf16.msra.mxu0 0
      %1126 = vmatprep.subr.bf16.mxu0 0
      %1127 = vmatpush1.bf16.msra.mxu0 %v1110
      %1128 = vmatprep.subr.bf16.mxu0 0
      %1129 = vmatpush2.bf16.msra.mxu0 0
      %1130 = vmatprep.subr.bf16.mxu0 0
      %1131 = vmatpush2.bf16.msra.mxu0 0
      %1132 = vmatprep.subr.bf16.mxu0 0
      %1133 = vmatpush2.bf16.msra.mxu0 0
      %1134 = vmatprep.subr.bf16.mxu0 0
      %1135 = vmatpush2.bf16.msra.mxu0 0
      %1136 = vmatprep.subr.bf16.mxu0 0
      %1137 = vmatpush2.bf16.msra.mxu0 0
      %1138 = vmatprep.subr.bf16.mxu0 0
      %1139 = vmatpush2.bf16.msra.mxu0 0
      %1140 = vmatprep.subr.bf16.mxu0 0
      %1141 = vmatpush2.bf16.msra.mxu0 0
      %1142 = vmatprep.subr.bf16.mxu0 0
      %1143 = vmatpush2.bf16.msra.mxu0 0
      %1144 = vmatprep.mubr.bf16.mxu0 0
      %1145 = vmatmul.mubr.bf16.gmra.mxu0 %v1107
      %v1146 = vpop.f32.mrf.mxu0
      %v1147 = vadd.f32 0.0, %v1146
      %v1148 = vpop.f32.mrf.mxu0
      %v1149 = vpop.f32.mrf.mxu0
      %v1150 = vpop.f32.mrf.mxu0
      %1151 = vdwg.mxu0
      %v1152 = vadd.f32 %v1088, %v1147
      %v1153 = vmul.f32 %v1152, 0.1
      %v1154 = vmax.f32 %v1152, %v1153
      %v1155 = vpack.c.bf16 %v1154, %v1154
      %vm1156 = vcmask 519168
      %1157 = vst.msk [vmem:[#allocation4 + $0x4] sm:$0xf] %vm1156, %v1155
      %v1158 = vld [vmem:[%s6] sm:$0xff]
      %1160 = vset.pattern.permute.xlu0 0
      %1161 = vperm.xlu0 %1160, %v1158
      %v1162 = vpop.permute.xlu0 %1161
      %v1164 = vld [vmem:[#allocation4] sm:$0xff]
      %vm1165 = vmpackc.low %vm556, %vm556
      %v1166 = vsel %vm1165, 65537, 0
      %1167 = vrot.lane.b32.xlu0 %v1166, 119
      %v1168 = vpop.permute.xlu0 %1167
      %v1169 = vrot.slane %v1168, 4
      %v1170 = vsel %vm564, %v1169, %v1168
      %vm1171 = vcmp.ne.s16.totalorder %v1170, 0
      %v1172 = vsel %vm1171, %v1164, 0
      %v1173 = vld [vmem:[%s5] sm:$0xf]
      %v1175 = vunpack.c.l.b16 %v1172
      %v1176 = vunpack.c.h.b16 %v1172
      %v1177 = vpack.c.b16 %v1175, %v1175
      %v1178 = vpack.c.b16 %v1176, %v1176
      %1179 = vrot.lane.b32.xlu0 %v1177, 9
      %v1180 = vpop.permute.xlu0 %1179
      %1181 = vrot.lane.b32.xlu0 %v1178, 9
      %v1182 = vpop.permute.xlu0 %1181
      %v1183 = vsel %vm582, %v1180, %v1182
      %v1185 = vsel %vm423, %v1173, 0
      %vm1187 = vcmask 1043456
      %v1189 = vsel %vm1187, %v1183, 0
      %1191 = vmatprep.subr.bf16.mxu0 0
      %1192 = vmatpush1.bf16.msra.mxu0 0
      %1193 = vmatprep.subr.bf16.mxu0 0
      %1194 = vmatpush1.bf16.msra.mxu0 0
      %1195 = vmatprep.subr.bf16.mxu0 0
      %1196 = vmatpush1.bf16.msra.mxu0 0
      %1197 = vmatprep.subr.bf16.mxu0 0
      %1198 = vmatpush1.bf16.msra.mxu0 0
      %1199 = vmatprep.subr.bf16.mxu0 0
      %1200 = vmatpush1.bf16.msra.mxu0 0
      %1201 = vmatprep.subr.bf16.mxu0 0
      %1202 = vmatpush1.bf16.msra.mxu0 0
      %1203 = vmatprep.subr.bf16.mxu0 0
      %1204 = vmatpush1.bf16.msra.mxu0 0
      %1205 = vmatprep.subr.bf16.mxu0 0
      %1206 = vmatpush1.bf16.msra.mxu0 %v1189
      %1207 = vmatprep.subr.bf16.mxu0 0
      %1208 = vmatpush2.bf16.msra.mxu0 0
      %1209 = vmatprep.subr.bf16.mxu0 0
      %1210 = vmatpush2.bf16.msra.mxu0 0
      %1211 = vmatprep.subr.bf16.mxu0 0
      %1212 = vmatpush2.bf16.msra.mxu0 0
      %1213 = vmatprep.subr.bf16.mxu0 0
      %1214 = vmatpush2.bf16.msra.mxu0 0
      %1215 = vmatprep.subr.bf16.mxu0 0
      %1216 = vmatpush2.bf16.msra.mxu0 0
      %1217 = vmatprep.subr.bf16.mxu0 0
      %1218 = vmatpush2.bf16.msra.mxu0 0
      %1219 = vmatprep.subr.bf16.mxu0 0
      %1220 = vmatpush2.bf16.msra.mxu0 0
      %1221 = vmatprep.subr.bf16.mxu0 0
      %1222 = vmatpush2.bf16.msra.mxu0 0
      %1223 = vmatprep.mubr.bf16.mxu0 0
      %1224 = vmatmul.mubr.bf16.gmra.mxu0 %v1185
      %v1225 = vpop.f32.mrf.mxu0
      %v1226 = vadd.f32 0.0, %v1225
      %v1227 = vpop.f32.mrf.mxu0
      %v1228 = vpop.f32.mrf.mxu0
      %v1229 = vpop.f32.mrf.mxu0
      %1230 = vdwg.mxu0
      %v1231 = vadd.f32 %v1162, %v1226
      %s1232 = scalar_lea.vmem %s5, 4
      %v1233 = vld [vmem:[%s1232] sm:$0xf]
      %v1235 = vunpack.c.l.b16 %v1164
      %v1236 = vunpack.c.h.b16 %v1164
      %v1237 = vpack.c.b16 %v1235, %v1235
      %v1238 = vpack.c.b16 %v1236, %v1236
      %1239 = vrot.lane.b32.xlu0 %v1237, 8
      %v1240 = vpop.permute.xlu0 %1239
      %1241 = vrot.lane.b32.xlu0 %v1238, 8
      %v1242 = vpop.permute.xlu0 %1241
      %v1243 = vsel %vm649, %v1240, %v1242
      %v1245 = vsel %vm423, %v1233, 0
      %v1248 = vsel %vm1187, %v1243, 0
      %1250 = vmatprep.subr.bf16.mxu0 0
      %1251 = vmatpush1.bf16.msra.mxu0 0
      %1252 = vmatprep.subr.bf16.mxu0 0
      %1253 = vmatpush1.bf16.msra.mxu0 0
      %1254 = vmatprep.subr.bf16.mxu0 0
      %1255 = vmatpush1.bf16.msra.mxu0 0
      %1256 = vmatprep.subr.bf16.mxu0 0
      %1257 = vmatpush1.bf16.msra.mxu0 0
      %1258 = vmatprep.subr.bf16.mxu0 0
      %1259 = vmatpush1.bf16.msra.mxu0 0
      %1260 = vmatprep.subr.bf16.mxu0 0
      %1261 = vmatpush1.bf16.msra.mxu0 0
      %1262 = vmatprep.subr.bf16.mxu0 0
      %1263 = vmatpush1.bf16.msra.mxu0 0
      %1264 = vmatprep.subr.bf16.mxu0 0
      %1265 = vmatpush1.bf16.msra.mxu0 %v1248
      %1266 = vmatprep.subr.bf16.mxu0 0
      %1267 = vmatpush2.bf16.msra.mxu0 0
      %1268 = vmatprep.subr.bf16.mxu0 0
      %1269 = vmatpush2.bf16.msra.mxu0 0
      %1270 = vmatprep.subr.bf16.mxu0 0
      %1271 = vmatpush2.bf16.msra.mxu0 0
      %1272 = vmatprep.subr.bf16.mxu0 0
      %1273 = vmatpush2.bf16.msra.mxu0 0
      %1274 = vmatprep.subr.bf16.mxu0 0
      %1275 = vmatpush2.bf16.msra.mxu0 0
      %1276 = vmatprep.subr.bf16.mxu0 0
      %1277 = vmatpush2.bf16.msra.mxu0 0
      %1278 = vmatprep.subr.bf16.mxu0 0
      %1279 = vmatpush2.bf16.msra.mxu0 0
      %1280 = vmatprep.subr.bf16.mxu0 0
      %1281 = vmatpush2.bf16.msra.mxu0 0
      %1282 = vmatprep.mubr.bf16.mxu0 0
      %1283 = vmatmul.mubr.bf16.gmra.mxu0 %v1245
      %v1284 = vpop.f32.mrf.mxu0
      %v1285 = vadd.f32 0.0, %v1284
      %v1286 = vpop.f32.mrf.mxu0
      %v1287 = vpop.f32.mrf.mxu0
      %v1288 = vpop.f32.mrf.mxu0
      %1289 = vdwg.mxu0
      %v1290 = vadd.f32 %v1231, %v1285
      %vm1291 = vmpackc.low %vm704, %vm704
      %v1292 = vsel %vm1291, 65537, 0
      %1293 = vrot.lane.b32.xlu0 %v1292, 121
      %v1294 = vpop.permute.xlu0 %1293
      %v1295 = vrot.slane %v1294, 4
      %v1296 = vsel %vm712, %v1295, %v1294
      %vm1297 = vcmp.ne.s16.totalorder %v1296, 0
      %v1298 = vsel %vm1297, %v1164, 0
      %s1299 = scalar_lea.vmem %s5, 8
      %v1300 = vld [vmem:[%s1299] sm:$0xf]
      %v1302 = vunpack.c.l.b16 %v1298
      %v1303 = vunpack.c.h.b16 %v1298
      %v1304 = vpack.c.b16 %v1302, %v1302
      %v1305 = vpack.c.b16 %v1303, %v1303
      %1306 = vrot.lane.b32.xlu0 %v1304, 7
      %v1307 = vpop.permute.xlu0 %1306
      %1308 = vrot.lane.b32.xlu0 %v1305, 7
      %v1309 = vpop.permute.xlu0 %1308
      %v1310 = vsel %vm731, %v1307, %v1309
      %v1312 = vsel %vm423, %v1300, 0
      %v1315 = vsel %vm1187, %v1310, 0
      %1317 = vmatprep.subr.bf16.mxu0 0
      %1318 = vmatpush1.bf16.msra.mxu0 0
      %1319 = vmatprep.subr.bf16.mxu0 0
      %1320 = vmatpush1.bf16.msra.mxu0 0
      %1321 = vmatprep.subr.bf16.mxu0 0
      %1322 = vmatpush1.bf16.msra.mxu0 0
      %1323 = vmatprep.subr.bf16.mxu0 0
      %1324 = vmatpush1.bf16.msra.mxu0 0
      %1325 = vmatprep.subr.bf16.mxu0 0
      %1326 = vmatpush1.bf16.msra.mxu0 0
      %1327 = vmatprep.subr.bf16.mxu0 0
      %1328 = vmatpush1.bf16.msra.mxu0 0
      %1329 = vmatprep.subr.bf16.mxu0 0
      %1330 = vmatpush1.bf16.msra.mxu0 0
      %1331 = vmatprep.subr.bf16.mxu0 0
      %1332 = vmatpush1.bf16.msra.mxu0 %v1315
      %1333 = vmatprep.subr.bf16.mxu0 0
      %1334 = vmatpush2.bf16.msra.mxu0 0
      %1335 = vmatprep.subr.bf16.mxu0 0
      %1336 = vmatpush2.bf16.msra.mxu0 0
      %1337 = vmatprep.subr.bf16.mxu0 0
      %1338 = vmatpush2.bf16.msra.mxu0 0
      %1339 = vmatprep.subr.bf16.mxu0 0
      %1340 = vmatpush2.bf16.msra.mxu0 0
      %1341 = vmatprep.subr.bf16.mxu0 0
      %1342 = vmatpush2.bf16.msra.mxu0 0
      %1343 = vmatprep.subr.bf16.mxu0 0
      %1344 = vmatpush2.bf16.msra.mxu0 0
      %1345 = vmatprep.subr.bf16.mxu0 0
      %1346 = vmatpush2.bf16.msra.mxu0 0
      %1347 = vmatprep.subr.bf16.mxu0 0
      %1348 = vmatpush2.bf16.msra.mxu0 0
      %1349 = vmatprep.mubr.bf16.mxu0 0
      %1350 = vmatmul.mubr.bf16.gmra.mxu0 %v1312
      %v1351 = vpop.f32.mrf.mxu0
      %v1352 = vadd.f32 0.0, %v1351
      %v1353 = vpop.f32.mrf.mxu0
      %v1354 = vpop.f32.mrf.mxu0
      %v1355 = vpop.f32.mrf.mxu0
      %1356 = vdwg.mxu0
      %v1357 = vadd.f32 %v1290, %v1352
      %1358 = vrot.lane.b32.xlu0 %v1166, 127
      %v1359 = vpop.permute.xlu0 %1358
      %v1360 = vrot.slane %v1359, 4
      %v1361 = vsel %vm784, %v1360, %v1359
      %vm1362 = vcmp.ne.s16.totalorder %v1361, 0
      %v1363 = vsel %vm1362, %v1164, 0
      %s1364 = scalar_lea.vmem %s5, 12
      %v1365 = vld [vmem:[%s1364] sm:$0xf]
      %v1367 = vunpack.c.l.b16 %v1363
      %v1368 = vunpack.c.h.b16 %v1363
      %v1369 = vpack.c.b16 %v1367, %v1367
      %v1370 = vpack.c.b16 %v1368, %v1368
      %1371 = vrot.lane.b32.xlu0 %v1369, 1
      %v1372 = vpop.permute.xlu0 %1371
      %1373 = vrot.lane.b32.xlu0 %v1370, 1
      %v1374 = vpop.permute.xlu0 %1373
      %v1375 = vsel %vm803, %v1372, %v1374
      %v1377 = vsel %vm423, %v1365, 0
      %v1380 = vsel %vm1187, %v1375, 0
      %1382 = vmatprep.subr.bf16.mxu0 0
      %1383 = vmatpush1.bf16.msra.mxu0 0
      %1384 = vmatprep.subr.bf16.mxu0 0
      %1385 = vmatpush1.bf16.msra.mxu0 0
      %1386 = vmatprep.subr.bf16.mxu0 0
      %1387 = vmatpush1.bf16.msra.mxu0 0
      %1388 = vmatprep.subr.bf16.mxu0 0
      %1389 = vmatpush1.bf16.msra.mxu0 0
      %1390 = vmatprep.subr.bf16.mxu0 0
      %1391 = vmatpush1.bf16.msra.mxu0 0
      %1392 = vmatprep.subr.bf16.mxu0 0
      %1393 = vmatpush1.bf16.msra.mxu0 0
      %1394 = vmatprep.subr.bf16.mxu0 0
      %1395 = vmatpush1.bf16.msra.mxu0 0
      %1396 = vmatprep.subr.bf16.mxu0 0
      %1397 = vmatpush1.bf16.msra.mxu0 %v1380
      %1398 = vmatprep.subr.bf16.mxu0 0
      %1399 = vmatpush2.bf16.msra.mxu0 0
      %1400 = vmatprep.subr.bf16.mxu0 0
      %1401 = vmatpush2.bf16.msra.mxu0 0
      %1402 = vmatprep.subr.bf16.mxu0 0
      %1403 = vmatpush2.bf16.msra.mxu0 0
      %1404 = vmatprep.subr.bf16.mxu0 0
      %1405 = vmatpush2.bf16.msra.mxu0 0
      %1406 = vmatprep.subr.bf16.mxu0 0
      %1407 = vmatpush2.bf16.msra.mxu0 0
      %1408 = vmatprep.subr.bf16.mxu0 0
      %1409 = vmatpush2.bf16.msra.mxu0 0
      %1410 = vmatprep.subr.bf16.mxu0 0
      %1411 = vmatpush2.bf16.msra.mxu0 0
      %1412 = vmatprep.subr.bf16.mxu0 0
      %1413 = vmatpush2.bf16.msra.mxu0 0
      %1414 = vmatprep.mubr.bf16.mxu0 0
      %1415 = vmatmul.mubr.bf16.gmra.mxu0 %v1377
      %v1416 = vpop.f32.mrf.mxu0
      %v1417 = vadd.f32 0.0, %v1416
      %v1418 = vpop.f32.mrf.mxu0
      %v1419 = vpop.f32.mrf.mxu0
      %v1420 = vpop.f32.mrf.mxu0
      %1421 = vdwg.mxu0
      %v1422 = vadd.f32 %v1357, %v1417
      %v1423 = vld [vmem:[#allocation4 + $0x4] sm:$0xf]
      %s1424 = scalar_lea.vmem %s5, 16
      %v1425 = vld [vmem:[%s1424] sm:$0xf]
      %v1427 = vsel %vm423, %v1425, 0
      %v1430 = vsel %vm1187, %v1423, 0
      %1432 = vmatprep.subr.bf16.mxu0 0
      %1433 = vmatpush1.bf16.msra.mxu0 0
      %1434 = vmatprep.subr.bf16.mxu0 0
      %1435 = vmatpush1.bf16.msra.mxu0 0
      %1436 = vmatprep.subr.bf16.mxu0 0
      %1437 = vmatpush1.bf16.msra.mxu0 0
      %1438 = vmatprep.subr.bf16.mxu0 0
      %1439 = vmatpush1.bf16.msra.mxu0 0
      %1440 = vmatprep.subr.bf16.mxu0 0
      %1441 = vmatpush1.bf16.msra.mxu0 0
      %1442 = vmatprep.subr.bf16.mxu0 0
      %1443 = vmatpush1.bf16.msra.mxu0 0
      %1444 = vmatprep.subr.bf16.mxu0 0
      %1445 = vmatpush1.bf16.msra.mxu0 0
      %1446 = vmatprep.subr.bf16.mxu0 0
      %1447 = vmatpush1.bf16.msra.mxu0 %v1430
      %1448 = vmatprep.subr.bf16.mxu0 0
      %1449 = vmatpush2.bf16.msra.mxu0 0
      %1450 = vmatprep.subr.bf16.mxu0 0
      %1451 = vmatpush2.bf16.msra.mxu0 0
      %1452 = vmatprep.subr.bf16.mxu0 0
      %1453 = vmatpush2.bf16.msra.mxu0 0
      %1454 = vmatprep.subr.bf16.mxu0 0
      %1455 = vmatpush2.bf16.msra.mxu0 0
      %1456 = vmatprep.subr.bf16.mxu0 0
      %1457 = vmatpush2.bf16.msra.mxu0 0
      %1458 = vmatprep.subr.bf16.mxu0 0
      %1459 = vmatpush2.bf16.msra.mxu0 0
      %1460 = vmatprep.subr.bf16.mxu0 0
      %1461 = vmatpush2.bf16.msra.mxu0 0
      %1462 = vmatprep.subr.bf16.mxu0 0
      %1463 = vmatpush2.bf16.msra.mxu0 0
      %1464 = vmatprep.mubr.bf16.mxu0 0
      %1465 = vmatmul.mubr.bf16.gmra.mxu0 %v1427
      %v1466 = vpop.f32.mrf.mxu0
      %v1467 = vadd.f32 0.0, %v1466
      %v1468 = vpop.f32.mrf.mxu0
      %v1469 = vpop.f32.mrf.mxu0
      %v1470 = vpop.f32.mrf.mxu0
      %1471 = vdwg.mxu0
      %v1472 = vadd.f32 %v1422, %v1467
      %1473 = vrot.lane.b32.xlu0 %v1292, 1
      %v1474 = vpop.permute.xlu0 %1473
      %vm1475 = vcmp.ne.s16.totalorder %v1474, 0
      %v1476 = vsel %vm1475, %v1423, 0
      %s1477 = scalar_lea.vmem %s5, 20
      %v1478 = vld [vmem:[%s1477] sm:$0xf]
      %v1480 = vunpack.c.l.b16 %v1476
      %v1481 = vpack.c.b16 %v1480, %v1480
      %1482 = vrot.lane.b32.xlu0 %v1481, 127
      %v1483 = vpop.permute.xlu0 %1482
      %v1485 = vsel %vm423, %v1478, 0
      %v1488 = vsel %vm1187, %v1483, 0
      %1490 = vmatprep.subr.bf16.mxu0 0
      %1491 = vmatpush1.bf16.msra.mxu0 0
      %1492 = vmatprep.subr.bf16.mxu0 0
      %1493 = vmatpush1.bf16.msra.mxu0 0
      %1494 = vmatprep.subr.bf16.mxu0 0
      %1495 = vmatpush1.bf16.msra.mxu0 0
      %1496 = vmatprep.subr.bf16.mxu0 0
      %1497 = vmatpush1.bf16.msra.mxu0 0
      %1498 = vmatprep.subr.bf16.mxu0 0
      %1499 = vmatpush1.bf16.msra.mxu0 0
      %1500 = vmatprep.subr.bf16.mxu0 0
      %1501 = vmatpush1.bf16.msra.mxu0 0
      %1502 = vmatprep.subr.bf16.mxu0 0
      %1503 = vmatpush1.bf16.msra.mxu0 0
      %1504 = vmatprep.subr.bf16.mxu0 0
      %1505 = vmatpush1.bf16.msra.mxu0 %v1488
      %1506 = vmatprep.subr.bf16.mxu0 0
      %1507 = vmatpush2.bf16.msra.mxu0 0
      %1508 = vmatprep.subr.bf16.mxu0 0
      %1509 = vmatpush2.bf16.msra.mxu0 0
      %1510 = vmatprep.subr.bf16.mxu0 0
      %1511 = vmatpush2.bf16.msra.mxu0 0
      %1512 = vmatprep.subr.bf16.mxu0 0
      %1513 = vmatpush2.bf16.msra.mxu0 0
      %1514 = vmatprep.subr.bf16.mxu0 0
      %1515 = vmatpush2.bf16.msra.mxu0 0
      %1516 = vmatprep.subr.bf16.mxu0 0
      %1517 = vmatpush2.bf16.msra.mxu0 0
      %1518 = vmatprep.subr.bf16.mxu0 0
      %1519 = vmatpush2.bf16.msra.mxu0 0
      %1520 = vmatprep.subr.bf16.mxu0 0
      %1521 = vmatpush2.bf16.msra.mxu0 0
      %1522 = vmatprep.mubr.bf16.mxu0 0
      %1523 = vmatmul.mubr.bf16.gmra.mxu0 %v1485
      %v1524 = vpop.f32.mrf.mxu0
      %v1525 = vadd.f32 0.0, %v1524
      %v1526 = vpop.f32.mrf.mxu0
      %v1527 = vpop.f32.mrf.mxu0
      %v1528 = vpop.f32.mrf.mxu0
      %1529 = vdwg.mxu0
      %v1530 = vadd.f32 %v1472, %v1525
      %1531 = vrot.lane.b32.xlu0 %v1166, 7
      %v1532 = vpop.permute.xlu0 %1531
      %vm1533 = vcmp.ne.s16.totalorder %v1532, 0
      %v1534 = vsel %vm1533, %v1423, 0
      %s1535 = scalar_lea.vmem %s5, 24
      %v1536 = vld [vmem:[%s1535] sm:$0xf]
      %v1538 = vunpack.c.l.b16 %v1534
      %v1539 = vpack.c.b16 %v1538, %v1538
      %1540 = vrot.lane.b32.xlu0 %v1539, 121
      %v1541 = vpop.permute.xlu0 %1540
      %v1543 = vsel %vm423, %v1536, 0
      %v1546 = vsel %vm1187, %v1541, 0
      %1548 = vmatprep.subr.bf16.mxu0 0
      %1549 = vmatpush1.bf16.msra.mxu0 0
      %1550 = vmatprep.subr.bf16.mxu0 0
      %1551 = vmatpush1.bf16.msra.mxu0 0
      %1552 = vmatprep.subr.bf16.mxu0 0
      %1553 = vmatpush1.bf16.msra.mxu0 0
      %1554 = vmatprep.subr.bf16.mxu0 0
      %1555 = vmatpush1.bf16.msra.mxu0 0
      %1556 = vmatprep.subr.bf16.mxu0 0
      %1557 = vmatpush1.bf16.msra.mxu0 0
      %1558 = vmatprep.subr.bf16.mxu0 0
      %1559 = vmatpush1.bf16.msra.mxu0 0
      %1560 = vmatprep.subr.bf16.mxu0 0
      %1561 = vmatpush1.bf16.msra.mxu0 0
      %1562 = vmatprep.subr.bf16.mxu0 0
      %1563 = vmatpush1.bf16.msra.mxu0 %v1546
      %1564 = vmatprep.subr.bf16.mxu0 0
      %1565 = vmatpush2.bf16.msra.mxu0 0
      %1566 = vmatprep.subr.bf16.mxu0 0
      %1567 = vmatpush2.bf16.msra.mxu0 0
      %1568 = vmatprep.subr.bf16.mxu0 0
      %1569 = vmatpush2.bf16.msra.mxu0 0
      %1570 = vmatprep.subr.bf16.mxu0 0
      %1571 = vmatpush2.bf16.msra.mxu0 0
      %1572 = vmatprep.subr.bf16.mxu0 0
      %1573 = vmatpush2.bf16.msra.mxu0 0
      %1574 = vmatprep.subr.bf16.mxu0 0
      %1575 = vmatpush2.bf16.msra.mxu0 0
      %1576 = vmatprep.subr.bf16.mxu0 0
      %1577 = vmatpush2.bf16.msra.mxu0 0
      %1578 = vmatprep.subr.bf16.mxu0 0
      %1579 = vmatpush2.bf16.msra.mxu0 0
      %1580 = vmatprep.mubr.bf16.mxu0 0
      %1581 = vmatmul.mubr.bf16.gmra.mxu0 %v1543
      %v1582 = vpop.f32.mrf.mxu0
      %v1583 = vadd.f32 0.0, %v1582
      %v1584 = vpop.f32.mrf.mxu0
      %v1585 = vpop.f32.mrf.mxu0
      %v1586 = vpop.f32.mrf.mxu0
      %1587 = vdwg.mxu0
      %v1588 = vadd.f32 %v1530, %v1583
      %s1589 = scalar_lea.vmem %s5, 28
      %v1590 = vld [vmem:[%s1589] sm:$0xf]
      %v1592 = vunpack.c.l.b16 %v1423
      %v1593 = vpack.c.b16 %v1592, %v1592
      %1594 = vrot.lane.b32.xlu0 %v1593, 120
      %v1595 = vpop.permute.xlu0 %1594
      %v1597 = vsel %vm423, %v1590, 0
      %v1600 = vsel %vm1187, %v1595, 0
      %1602 = vmatprep.subr.bf16.mxu0 0
      %1603 = vmatpush1.bf16.msra.mxu0 0
      %1604 = vmatprep.subr.bf16.mxu0 0
      %1605 = vmatpush1.bf16.msra.mxu0 0
      %1606 = vmatprep.subr.bf16.mxu0 0
      %1607 = vmatpush1.bf16.msra.mxu0 0
      %1608 = vmatprep.subr.bf16.mxu0 0
      %1609 = vmatpush1.bf16.msra.mxu0 0
      %1610 = vmatprep.subr.bf16.mxu0 0
      %1611 = vmatpush1.bf16.msra.mxu0 0
      %1612 = vmatprep.subr.bf16.mxu0 0
      %1613 = vmatpush1.bf16.msra.mxu0 0
      %1614 = vmatprep.subr.bf16.mxu0 0
      %1615 = vmatpush1.bf16.msra.mxu0 0
      %1616 = vmatprep.subr.bf16.mxu0 0
      %1617 = vmatpush1.bf16.msra.mxu0 %v1600
      %1618 = vmatprep.subr.bf16.mxu0 0
      %1619 = vmatpush2.bf16.msra.mxu0 0
      %1620 = vmatprep.subr.bf16.mxu0 0
      %1621 = vmatpush2.bf16.msra.mxu0 0
      %1622 = vmatprep.subr.bf16.mxu0 0
      %1623 = vmatpush2.bf16.msra.mxu0 0
      %1624 = vmatprep.subr.bf16.mxu0 0
      %1625 = vmatpush2.bf16.msra.mxu0 0
      %1626 = vmatprep.subr.bf16.mxu0 0
      %1627 = vmatpush2.bf16.msra.mxu0 0
      %1628 = vmatprep.subr.bf16.mxu0 0
      %1629 = vmatpush2.bf16.msra.mxu0 0
      %1630 = vmatprep.subr.bf16.mxu0 0
      %1631 = vmatpush2.bf16.msra.mxu0 0
      %1632 = vmatprep.subr.bf16.mxu0 0
      %1633 = vmatpush2.bf16.msra.mxu0 0
      %1634 = vmatprep.mubr.bf16.mxu0 0
      %1635 = vmatmul.mubr.bf16.gmra.mxu0 %v1597
      %v1636 = vpop.f32.mrf.mxu0
      %v1637 = vadd.f32 0.0, %v1636
      %v1638 = vpop.f32.mrf.mxu0
      %v1639 = vpop.f32.mrf.mxu0
      %v1640 = vpop.f32.mrf.mxu0
      %1641 = vdwg.mxu0
      %v1642 = vadd.f32 %v1588, %v1637
      %1643 = vrot.lane.b32.xlu0 %v1292, 9
      %v1644 = vpop.permute.xlu0 %1643
      %vm1645 = vcmp.ne.s16.totalorder %v1644, 0
      %v1646 = vsel %vm1645, %v1423, 0
      %s1647 = scalar_lea.vmem %s5, 32
      %v1648 = vld [vmem:[%s1647] sm:$0xf]
      %v1650 = vunpack.c.l.b16 %v1646
      %v1651 = vpack.c.b16 %v1650, %v1650
      %1652 = vrot.lane.b32.xlu0 %v1651, 119
      %v1653 = vpop.permute.xlu0 %1652
      %v1655 = vsel %vm423, %v1648, 0
      %v1658 = vsel %vm1187, %v1653, 0
      %1660 = vmatprep.subr.bf16.mxu0 0
      %1661 = vmatpush1.bf16.msra.mxu0 0
      %1662 = vmatprep.subr.bf16.mxu0 0
      %1663 = vmatpush1.bf16.msra.mxu0 0
      %1664 = vmatprep.subr.bf16.mxu0 0
      %1665 = vmatpush1.bf16.msra.mxu0 0
      %1666 = vmatprep.subr.bf16.mxu0 0
      %1667 = vmatpush1.bf16.msra.mxu0 0
      %1668 = vmatprep.subr.bf16.mxu0 0
      %1669 = vmatpush1.bf16.msra.mxu0 0
      %1670 = vmatprep.subr.bf16.mxu0 0
      %1671 = vmatpush1.bf16.msra.mxu0 0
      %1672 = vmatprep.subr.bf16.mxu0 0
      %1673 = vmatpush1.bf16.msra.mxu0 0
      %1674 = vmatprep.subr.bf16.mxu0 0
      %1675 = vmatpush1.bf16.msra.mxu0 %v1658
      %1676 = vmatprep.subr.bf16.mxu0 0
      %1677 = vmatpush2.bf16.msra.mxu0 0
      %1678 = vmatprep.subr.bf16.mxu0 0
      %1679 = vmatpush2.bf16.msra.mxu0 0
      %1680 = vmatprep.subr.bf16.mxu0 0
      %1681 = vmatpush2.bf16.msra.mxu0 0
      %1682 = vmatprep.subr.bf16.mxu0 0
      %1683 = vmatpush2.bf16.msra.mxu0 0
      %1684 = vmatprep.subr.bf16.mxu0 0
      %1685 = vmatpush2.bf16.msra.mxu0 0
      %1686 = vmatprep.subr.bf16.mxu0 0
      %1687 = vmatpush2.bf16.msra.mxu0 0
      %1688 = vmatprep.subr.bf16.mxu0 0
      %1689 = vmatpush2.bf16.msra.mxu0 0
      %1690 = vmatprep.subr.bf16.mxu0 0
      %1691 = vmatpush2.bf16.msra.mxu0 0
      %1692 = vmatprep.mubr.bf16.mxu0 0
      %1693 = vmatmul.mubr.bf16.gmra.mxu0 %v1655
      %v1694 = vpop.f32.mrf.mxu0
      %v1695 = vadd.f32 0.0, %v1694
      %v1696 = vpop.f32.mrf.mxu0
      %v1697 = vpop.f32.mrf.mxu0
      %v1698 = vpop.f32.mrf.mxu0
      %1699 = vdwg.mxu0
      %v1700 = vadd.f32 %v1642, %v1695
      %v1701 = vmul.f32 %v1700, 0.1
      %v1702 = vmax.f32 %v1700, %v1701
      %vm1703 = vcmask 523264
      %1704 = vst.msk [vmem:[%s276] sm:$0xff] %vm1703, %v1702
      %p1705 = scmp.lt.s32.totalorder %s18, 1
      %s1706 = scalar_select %p1705, %s18, 1
      %s1707 = smul.addr %s1706, 8
      %s1708 = scalar_lea.vmem %s7, %s1707
      // Predicated region
      $region49: #{down_forward.1} parent=47 // pred_check
        %p1709 = pneg %p188
      $region50: #{down_forward.1} parent=47 // pred_check_branch
        %1711 = sbr.rel (%p1709) target = $region52
      $region51: #{down_forward.1} parent=47 // pred_region
        _
      $region52: #{down_forward.1} parent=47 // pred_fallthru
        _
    $region48: #{down_forward.1} parent=5 // pred_fallthru
      _
    %p1712 = scmp.le.s32.totalorder 2, %s13
    // Predicated region
    $region53: #{down_forward.1} parent=5 // pred_check
      %p1713 = pneg %p1712
    $region54: #{down_forward.1} parent=5 // pred_check_branch
      %1715 = sbr.rel (%p1713) target = $region56
    $region55: #{down_forward.1} parent=5 // pred_region
      %s1716 = ssub.s32 %s13, 2
      // Predicated region
      $region57: #{down_forward.1} parent=55 // pred_check
        %p1717 = pneg %p194
      $region58: #{down_forward.1} parent=55 // pred_check_branch
        %1719 = sbr.rel (%p1717) target = $region60
      $region59: #{down_forward.1} parent=55 // pred_region
        %p1720 = scmp.lt.s32.totalorder %s19, 1
        %s1721 = scalar_select %p1720, %s19, 1
        %s1722 = smul.addr %s1721, 8
        %s1723 = scalar_lea.vmem %s7, %s1722
      $region60: #{down_forward.1} parent=55 // pred_fallthru
        _
    $region56: #{down_forward.1} parent=5 // pred_fallthru
      _
  $region6: #{down_forward.1} parent=0 // loop_footer
    %s17 = sadd.s32 1, %s13
  $region7: #{down_forward.1} parent=0 // loop_footer_branch
    %12 = sbr.rel target = $region3
  $region8: #{down_forward.1} parent=0 // loop_exit
    _

</llo_original>
